<compile_context>
chip_gen: v6e
topology: v6e:2x2x1
jax: 0.10.0
libtpu: 0.0.40
codegen_flags: <defaults>
</compile_context>

<pallas_src>
import functools

import jax
import jax.numpy as jnp
from jax.experimental import pallas as pl
from jax.experimental.pallas import tpu as pltpu

BN_EPS = 1e-5
LEAKY_SLOPE = 0.01          # nn.LeakyReLU default negative_slope
LANE = 128


def _round_up(a, b):
    return ((a + b - 1) // b) * b


def _pick_tile_h(H, W, target_rows):
    """Largest divisor of H whose row tile (tile_h*W matmul rows) stays within
    target_rows.  Divisor => no padded rows ever enter the BN statistics."""
    best = 1
    for th in range(1, H + 1):
        if H % th == 0 and th * W <= max(target_rows, W):
            best = th
    return best


def _pick_tiles_per_step(T, tile_m, Cp, out_bytes):
    """Conv tiles streamed per pass-2 grid step (bigger blocks -> fewer
    ~0.35us grid-step overheads -> closer to the HBM roofline)."""
    per_tile = tile_m * Cp * (2 + out_bytes) * 2      # bf16 in + out, double-buffered
    cap = max(1, min(4096 // max(tile_m, 1), (12 << 20) // max(per_tile, 1)))
    best = 1
    for d in range(1, T + 1):
        if T % d == 0 and d <= cap:
            best = d
    return best


def _vmem_capacity_bytes():
    try:
        return int(pltpu.get_tpu_info().vmem_capacity_bytes)
    except Exception:
        return 64 << 20       # conservative fallback: v7x physical VMEM per TC


@functools.partial(jax.jit, static_argnames=("target_rows", "force_two_pass"))
def conv_bn_act(x_nchw, w_oihw, gamma, beta, *, target_rows=512,
                force_two_pass=False):
    """x_nchw: (N, Cin, H, W); w_oihw: (Cout, Cin, KH, KW); gamma/beta: (Cout,)"""
    N, Cin, H, W = x_nchw.shape
    Cout, Cin_w, KH, KW = w_oihw.shape
    assert Cin_w == Cin
    pad = KH // 2                      # stride=1, padding=kernel//2 ("same")
    out_dtype = x_nchw.dtype
    out_bytes = jnp.dtype(out_dtype).itemsize

    tile_h = _pick_tile_h(H, W, target_rows)
    n_h = H // tile_h
    T = N * n_h                        # row tiles == pass-1 grid steps
    tile_m = tile_h * W                # matmul rows (output pixels) per tile
    M = N * H * W                      # pixels entering the BN statistics
    K = KH * KW * Cin                  # contraction size
    Kp = _round_up(K, LANE)            # padded only in VMEM / tiny weights
    Cp = _round_up(Cout, LANE)         # lane-dense output channels
    Hh = tile_h + 2 * pad              # block height incl. halo rows
    Wp2 = W + 2 * pad

    # ---- wrapper-side prep (cheap): NCHW->NHWC, SAME pad, row unfold w/ halo.
    # Only the 2 halo rows per tile are duplicated -- no im2col in HBM.
    x_nhwc = jnp.transpose(x_nchw, (0, 2, 3, 1))
    x_pad = jnp.pad(x_nhwc, ((0, 0), (pad, pad), (pad, pad), (0, 0)))
    if n_h == 1:
        xu = x_pad.reshape(T, Hh, Wp2, Cin)
    else:
        xu = jnp.stack(
            [x_pad[:, i * tile_h:i * tile_h + Hh] for i in range(n_h)], axis=1
        ).reshape(T, Hh, Wp2, Cin)
    xu = xu.astype(jnp.bfloat16)       # bf16 HBM stream -> bf16-native MXU

    # Flattened conv weights in (kh, kw, cin) contraction order; only this
    # tiny matrix carries the K->Kp / Cout->Cp padding.
    w_mat = jnp.transpose(w_oihw, (2, 3, 1, 0)).reshape(K, Cout)
    w_mat = jnp.pad(w_mat, ((0, Kp - K), (0, Cp - Cout))).astype(jnp.bfloat16)

    gamma_p = jnp.pad(gamma.astype(jnp.float32), (0, Cp - Cout)).reshape(1, Cp)
    beta_p = jnp.pad(beta.astype(jnp.float32), (0, Cp - Cout)).reshape(1, Cp)

    def build_patch(xb, pscr):
        # In-kernel im2col: KH*KW static halo slices -> VMEM patch scratch,
        # then one lane-dense (tile_m, Kp) matmul operand.  Zero padding of
        # the contraction lanes lives only in VMEM.
        if Kp > K:
            pscr[:, :, K:] = jnp.zeros((tile_h, W, Kp - K), dtype=jnp.bfloat16)
        for kh in range(KH):
            for kw in range(KW):
                j = kh * KW + kw
                pscr[:, :, j * Cin:(j + 1) * Cin] = xb[kh:kh + tile_h,
                                                       kw:kw + W, :]
        return pscr[...].reshape(tile_m, Kp)

    # ---- path selection: fuse the BN+act epilogue when the whole conv output
    # is VMEM-resident (threshold is generation-dependent: v7x = 64 MiB).
    vmem_cap = _vmem_capacity_bytes()
    fused_need = (2 * T * tile_m * Cp * out_bytes     # resident output (2x margin)
                  + 3 * Hh * Wp2 * Cin * 2            # pipelined input blocks
                  + 2 * Kp * Cp * 2                   # weights
                  + tile_h * W * Kp * 2               # patch scratch
                  + (1 << 20))
    use_fused = (not force_two_pass) and fused_need <= min(vmem_cap // 2, 48 << 20)

    if use_fused:
        vmem_limit = int(min(vmem_cap - (8 << 20),
                             max(48 << 20, fused_need + (16 << 20))))

        def fused_kernel(x_ref, w_ref, g_ref, b_ref, o_ref,
                         pscr, sum_sc, ssq_sc, c_sc):
            t = pl.program_id(0)
            patch = build_patch(x_ref[0], pscr)
            acc = jnp.dot(patch, w_ref[...],
                          preferred_element_type=jnp.float32)    # (tile_m, Cp)
            o_ref[t] = acc.astype(o_ref.dtype)      # conv stays VMEM-resident

            # Shifted (first-tile-mean centered) sum/sumsq accumulation:
            # avoids E[x^2]-E[x]^2 cancellation.
            @pl.when(t == 0)
            def _init():
                c_sc[...] = jnp.sum(acc, axis=0, keepdims=True) * (1.0 / tile_m)
                sum_sc[...] = jnp.zeros_like(sum_sc)
                ssq_sc[...] = jnp.zeros_like(ssq_sc)

            d = acc - c_sc[...]
            sum_sc[...] += jnp.sum(d, axis=0, keepdims=True)
            ssq_sc[...] += jnp.sum(d * d, axis=0, keepdims=True)

            @pl.when(t == pl.num_programs(0) - 1)
            def _finalize():
                inv_m = 1.0 / float(M)
                mean_c = sum_sc[...] * inv_m
                mean = mean_c + c_sc[...]
                var = jnp.maximum(ssq_sc[...] * inv_m - mean_c * mean_c, 0.0)
                scale = g_ref[...] * jax.lax.rsqrt(var + BN_EPS)   # (1, Cp)
                shift = b_ref[...] - mean * scale

                def apply(ti, carry):
                    y = o_ref[ti].astype(jnp.float32) * scale + shift
                    o_ref[ti] = jnp.where(y >= 0, y,
                                          LEAKY_SLOPE * y).astype(o_ref.dtype)
                    return carry

                jax.lax.fori_loop(0, T, apply, 0)

        out_full = pl.pallas_call(
            fused_kernel,
            grid=(T,),
            in_specs=[
                pl.BlockSpec((1, Hh, Wp2, Cin), lambda t: (t, 0, 0, 0)),
                pl.BlockSpec((Kp, Cp), lambda t: (0, 0)),
                pl.BlockSpec((1, Cp), lambda t: (0, 0)),
                pl.BlockSpec((1, Cp), lambda t: (0, 0)),
            ],
            out_specs=pl.BlockSpec((T, tile_m, Cp), lambda t: (0, 0, 0)),
            out_shape=jax.ShapeDtypeStruct((T, tile_m, Cp), out_dtype),
            scratch_shapes=[
                pltpu.VMEM((tile_h, W, Kp), jnp.bfloat16),
                pltpu.VMEM((1, Cp), jnp.float32),
                pltpu.VMEM((1, Cp), jnp.float32),
                pltpu.VMEM((1, Cp), jnp.float32),
            ],
            compiler_params=pltpu.CompilerParams(
                dimension_semantics=("arbitrary",),   # resident output + stats
                vmem_limit_bytes=vmem_limit),
        )(xu, w_mat, gamma_p, beta_p)

    else:
        # ---- Pass 1: conv + PER-TILE partial stats (no resident accumulator
        # -> "parallel" grid, megacore-shardable on v7x). ----
        def conv_stats_kernel(x_ref, w_ref, conv_ref, psum_ref, pssq_ref, pscr):
            patch = build_patch(x_ref[0], pscr)
            acc = jnp.dot(patch, w_ref[...],
                          preferred_element_type=jnp.float32)    # (tile_m, Cp)
            conv_ref[0] = acc.astype(conv_ref.dtype)              # bf16 intermediate
            psum_ref[0] = jnp.sum(acc, axis=0, keepdims=True)
            pssq_ref[0] = jnp.sum(acc * acc, axis=0, keepdims=True)

        conv_i, psum, pssq = pl.pallas_call(
            conv_stats_kernel,
            grid=(T,),
            in_specs=[
                # NOTE: add pipeline_mode=pl.Buffered(3) here if a trace shows
                # exposed DMA between the short matmul steps.
                pl.BlockSpec((1, Hh, Wp2, Cin), lambda t: (t, 0, 0, 0)),
                pl.BlockSpec((Kp, Cp), lambda t: (0, 0)),
            ],
            out_specs=(
                pl.BlockSpec((1, tile_m, Cp), lambda t: (t, 0, 0)),
                pl.BlockSpec((1, 1, Cp), lambda t: (t, 0, 0)),
                pl.BlockSpec((1, 1, Cp), lambda t: (t, 0, 0)),
            ),
            out_shape=(
                jax.ShapeDtypeStruct((T, tile_m, Cp), jnp.bfloat16),
                jax.ShapeDtypeStruct((T, 1, Cp), jnp.float32),
                jax.ShapeDtypeStruct((T, 1, Cp), jnp.float32),
            ),
            scratch_shapes=[pltpu.VMEM((tile_h, W, Kp), jnp.bfloat16)],
            compiler_params=pltpu.CompilerParams(
                dimension_semantics=("parallel",)),
        )(xu, w_mat)

        # ---- BN stats: Chan-style combine of per-tile partials (tiny (T, Cp)
        # arrays, centered per tile -> no global E[x^2]-E[x]^2 cancellation).
        # Every tile holds exactly tile_m real pixels (tile_h divides H).
        inv_t = 1.0 / float(tile_m)
        mean_t = psum[:, 0, :] * inv_t                               # (T, Cp)
        var_t = jnp.maximum(pssq[:, 0, :] * inv_t - mean_t * mean_t, 0.0)
        mean = jnp.mean(mean_t, axis=0, keepdims=True)               # (1, Cp)
        var = (jnp.mean(var_t, axis=0, keepdims=True)
               + jnp.mean((mean_t - mean) ** 2, axis=0, keepdims=True))
        scale = gamma_p * jax.lax.rsqrt(var + BN_EPS)
        shift = beta_p - mean * scale
        scale3 = scale.reshape(1, 1, Cp)
        shift3 = shift.reshape(1, 1, Cp)

        # ---- Pass 2: streaming BN affine + LeakyReLU, several conv tiles per
        # grid step (lane-dense, large blocks -> HBM roofline). ----
        tb = _pick_tiles_per_step(T, tile_m, Cp, out_bytes)

        def bn_act_kernel(conv_ref, s_ref, b_ref, o_ref):
            y = conv_ref[...].astype(jnp.float32) * s_ref[...] + b_ref[...]
            o_ref[...] = jnp.where(y >= 0, y, LEAKY_SLOPE * y).astype(o_ref.dtype)

        # Alias the conv intermediate into the output when dtypes match
        # (saves a second Mp x Cp HBM allocation).
        alias = ({0: 0} if jnp.dtype(out_dtype) == jnp.dtype(jnp.bfloat16)
                 else {})

        out_full = pl.pallas_call(
            bn_act_kernel,
            grid=(T // tb,),
            in_specs=[
                pl.BlockSpec((tb, tile_m, Cp), lambda i: (i, 0, 0)),
                pl.BlockSpec((1, 1, Cp), lambda i: (0, 0, 0)),
                pl.BlockSpec((1, 1, Cp), lambda i: (0, 0, 0)),
            ],
            out_specs=pl.BlockSpec((tb, tile_m, Cp), lambda i: (i, 0, 0)),
            out_shape=jax.ShapeDtypeStruct((T, tile_m, Cp), out_dtype),
            input_output_aliases=alias,
            compiler_params=pltpu.CompilerParams(
                dimension_semantics=("parallel",)),
        )(conv_i, scale3, shift3)

    # ---- back to the module's NCHW interface.  Channel slice happens before
    # the transpose, so the one unavoidable layout copy is Cout-wide, not Cp.
    out_nhwc = out_full.reshape(N, n_h, tile_h, W, Cp)[..., :Cout]
    out_nhwc = out_nhwc.reshape(N, H, W, Cout)
    return jnp.transpose(out_nhwc, (0, 3, 1, 2))


def reference(x_nchw, w_oihw, gamma, beta):
    conv = jax.lax.conv_general_dilated(
        x_nchw, w_oihw, window_strides=(1, 1), padding="SAME",
        dimension_numbers=("NCHW", "OIHW", "NCHW")).astype(jnp.float32)
    mean = conv.mean(axis=(0, 2, 3), keepdims=True)
    var = ((conv - mean) ** 2).mean(axis=(0, 2, 3), keepdims=True)
    y = (conv - mean) * jax.lax.rsqrt(var + BN_EPS)
    y = y * gamma.reshape(1, -1, 1, 1) + beta.reshape(1, -1, 1, 1)
    return jnp.where(y > 0, y, LEAKY_SLOPE * y)


if __name__ == "__main__":
    key = jax.random.PRNGKey(0)
    kx, kw = jax.random.split(key)

    N, Cin, Cout, H, W, Kk = 2, 4, 8, 16, 16, 3

    x = jax.random.normal(kx, (N, Cin, H, W), dtype=jnp.float32)
    w = 0.1 * jax.random.normal(kw, (Cout, Cin, Kk, Kk), dtype=jnp.float32)
    gamma = jnp.linspace(0.5, 1.5, Cout, dtype=jnp.float32)
    beta = jnp.linspace(-0.1, 0.1, Cout, dtype=jnp.float32)

    ref = reference(x, w, gamma, beta)

    # Fused single-pass path (auto-selected: conv output easily fits VMEM here).
    out_fused = jax.block_until_ready(conv_bn_act(x, w, gamma, beta))
    # General two-pass path (forced, smaller row tiles -> multi-step grid,
    # exercises the parallel per-tile stats + streaming epilogue).
    out_2pass = jax.block_until_ready(
        conv_bn_act(x, w, gamma, beta, force_two_pass=True, target_rows=128))

    assert out_fused.shape == (N, Cout, H, W)
    assert out_2pass.shape == (N, Cout, H, W)
    # bf16 conv path (bf16 MXU inputs + bf16 conv intermediate) vs. an all-f32
    # reference: tolerance sized for ~0.4% bf16 rounding amplified by gamma/std.
    assert jnp.allclose(out_fused, ref, atol=5e-2, rtol=5e-2), "fused mismatch"
    assert jnp.allclose(out_2pass, ref, atol=5e-2, rtol=5e-2), "two-pass mismatch"

    print("KERNEL_OK")
</pallas_src>

<mosaic_0001>
module attributes {stable_mosaic.version = 11 : i64} {
  func.func @fused_kernel(%arg0: i32, %arg1: memref<1x18x18x4xbf16, #tpu.memory_space<vmem>>, %arg2: memref<128x128xbf16, #tpu.memory_space<vmem>>, %arg3: memref<1x128xf32, #tpu.memory_space<vmem>>, %arg4: memref<1x128xf32, #tpu.memory_space<vmem>>, %arg5: memref<2x256x128xf32, #tpu.memory_space<vmem>>, %arg6: memref<16x16x128xbf16, #tpu.memory_space<vmem>>, %arg7: memref<1x128xf32, #tpu.memory_space<vmem>>, %arg8: memref<1x128xf32, #tpu.memory_space<vmem>>, %arg9: memref<1x128xf32, #tpu.memory_space<vmem>>) attributes {dimension_semantics = [#tpu.dimension_semantics<arbitrary>], iteration_bounds = array<i64: 2>, scalar_prefetch = 0 : i64, scratch_operands = 4 : i64, tpu.core_type = #tpu.core_type<tc>, window_params = [{transform_indices = @transform_0, window_bounds = array<i64: 1, 18, 18, 4>}, {pipeline_mode = #tpu.pipeline_mode<synchronous>, transform_indices = @transform_1, window_bounds = array<i64: 128, 128>}, {pipeline_mode = #tpu.pipeline_mode<synchronous>, transform_indices = @transform_2, window_bounds = array<i64: 1, 128>}, {pipeline_mode = #tpu.pipeline_mode<synchronous>, transform_indices = @transform_3, window_bounds = array<i64: 1, 128>}, {pipeline_mode = #tpu.pipeline_mode<synchronous>, transform_indices = @transform_4, window_bounds = array<i64: 2, 256, 128>}]} {
    %c0 = arith.constant 0 : index
    %c0_0 = arith.constant 0 : index
    %c0_1 = arith.constant 0 : index
    %c0_2 = arith.constant 0 : index
    %0 = vector.load %arg1[%c0, %c0_0, %c0_1, %c0_2] : memref<1x18x18x4xbf16, #tpu.memory_space<vmem>>, vector<1x18x18x4xbf16>
    %1 = vector.shape_cast %0 : vector<1x18x18x4xbf16> to vector<18x18x4xbf16>
    %cst = arith.constant 0.000000e+00 : bf16
    %2 = vector.broadcast %cst : bf16 to vector<16x16x92xbf16>
    %c0_3 = arith.constant 0 : index
    %c0_4 = arith.constant 0 : index
    %c36 = arith.constant 36 : index
    %3 = vector.load %arg6[%c0_3, %c0_4, %c36] : memref<16x16x128xbf16, #tpu.memory_space<vmem>>, vector<16x16x92xbf16>
    tpu.vector_store %arg6[%c0_3, %c0_4, %c36], %2 {strides = array<i32>} : memref<16x16x128xbf16, #tpu.memory_space<vmem>>, vector<16x16x92xbf16>,
    %4 = vector.extract_strided_slice %1 {offsets = [0, 0, 0], sizes = [16, 16, 4], strides = [1, 1, 1]} : vector<18x18x4xbf16> to vector<16x16x4xbf16>
    %c0_5 = arith.constant 0 : index
    %c0_6 = arith.constant 0 : index
    %c0_7 = arith.constant 0 : index
    %5 = vector.load %arg6[%c0_5, %c0_6, %c0_7] : memref<16x16x128xbf16, #tpu.memory_space<vmem>>, vector<16x16x4xbf16>
    tpu.vector_store %arg6[%c0_5, %c0_6, %c0_7], %4 {strides = array<i32>} : memref<16x16x128xbf16, #tpu.memory_space<vmem>>, vector<16x16x4xbf16>,
    %6 = vector.extract_strided_slice %1 {offsets = [0, 1, 0], sizes = [16, 16, 4], strides = [1, 1, 1]} : vector<18x18x4xbf16> to vector<16x16x4xbf16>
    %c0_8 = arith.constant 0 : index
    %c0_9 = arith.constant 0 : index
    %c4 = arith.constant 4 : index
    %7 = vector.load %arg6[%c0_8, %c0_9, %c4] : memref<16x16x128xbf16, #tpu.memory_space<vmem>>, vector<16x16x4xbf16>
    tpu.vector_store %arg6[%c0_8, %c0_9, %c4], %6 {strides = array<i32>} : memref<16x16x128xbf16, #tpu.memory_space<vmem>>, vector<16x16x4xbf16>,
    %8 = vector.extract_strided_slice %1 {offsets = [0, 2, 0], sizes = [16, 16, 4], strides = [1, 1, 1]} : vector<18x18x4xbf16> to vector<16x16x4xbf16>
    %c0_10 = arith.constant 0 : index
    %c0_11 = arith.constant 0 : index
    %c8 = arith.constant 8 : index
    %9 = vector.load %arg6[%c0_10, %c0_11, %c8] : memref<16x16x128xbf16, #tpu.memory_space<vmem>>, vector<16x16x4xbf16>
    tpu.vector_store %arg6[%c0_10, %c0_11, %c8], %8 {strides = array<i32>} : memref<16x16x128xbf16, #tpu.memory_space<vmem>>, vector<16x16x4xbf16>,
    %10 = vector.extract_strided_slice %1 {offsets = [1, 0, 0], sizes = [16, 16, 4], strides = [1, 1, 1]} : vector<18x18x4xbf16> to vector<16x16x4xbf16>
    %c0_12 = arith.constant 0 : index
    %c0_13 = arith.constant 0 : index
    %c12 = arith.constant 12 : index
    %11 = vector.load %arg6[%c0_12, %c0_13, %c12] : memref<16x16x128xbf16, #tpu.memory_space<vmem>>, vector<16x16x4xbf16>
    tpu.vector_store %arg6[%c0_12, %c0_13, %c12], %10 {strides = array<i32>} : memref<16x16x128xbf16, #tpu.memory_space<vmem>>, vector<16x16x4xbf16>,
    %12 = vector.extract_strided_slice %1 {offsets = [1, 1, 0], sizes = [16, 16, 4], strides = [1, 1, 1]} : vector<18x18x4xbf16> to vector<16x16x4xbf16>
    %c0_14 = arith.constant 0 : index
    %c0_15 = arith.constant 0 : index
    %c16 = arith.constant 16 : index
    %13 = vector.load %arg6[%c0_14, %c0_15, %c16] : memref<16x16x128xbf16, #tpu.memory_space<vmem>>, vector<16x16x4xbf16>
    tpu.vector_store %arg6[%c0_14, %c0_15, %c16], %12 {strides = array<i32>} : memref<16x16x128xbf16, #tpu.memory_space<vmem>>, vector<16x16x4xbf16>,
    %14 = vector.extract_strided_slice %1 {offsets = [1, 2, 0], sizes = [16, 16, 4], strides = [1, 1, 1]} : vector<18x18x4xbf16> to vector<16x16x4xbf16>
    %c0_16 = arith.constant 0 : index
    %c0_17 = arith.constant 0 : index
    %c20 = arith.constant 20 : index
    %15 = vector.load %arg6[%c0_16, %c0_17, %c20] : memref<16x16x128xbf16, #tpu.memory_space<vmem>>, vector<16x16x4xbf16>
    tpu.vector_store %arg6[%c0_16, %c0_17, %c20], %14 {strides = array<i32>} : memref<16x16x128xbf16, #tpu.memory_space<vmem>>, vector<16x16x4xbf16>,
    %16 = vector.extract_strided_slice %1 {offsets = [2, 0, 0], sizes = [16, 16, 4], strides = [1, 1, 1]} : vector<18x18x4xbf16> to vector<16x16x4xbf16>
    %c0_18 = arith.constant 0 : index
    %c0_19 = arith.constant 0 : index
    %c24 = arith.constant 24 : index
    %17 = vector.load %arg6[%c0_18, %c0_19, %c24] : memref<16x16x128xbf16, #tpu.memory_space<vmem>>, vector<16x16x4xbf16>
    tpu.vector_store %arg6[%c0_18, %c0_19, %c24], %16 {strides = array<i32>} : memref<16x16x128xbf16, #tpu.memory_space<vmem>>, vector<16x16x4xbf16>,
    %18 = vector.extract_strided_slice %1 {offsets = [2, 1, 0], sizes = [16, 16, 4], strides = [1, 1, 1]} : vector<18x18x4xbf16> to vector<16x16x4xbf16>
    %c0_20 = arith.constant 0 : index
    %c0_21 = arith.constant 0 : index
    %c28 = arith.constant 28 : index
    %19 = vector.load %arg6[%c0_20, %c0_21, %c28] : memref<16x16x128xbf16, #tpu.memory_space<vmem>>, vector<16x16x4xbf16>
    tpu.vector_store %arg6[%c0_20, %c0_21, %c28], %18 {strides = array<i32>} : memref<16x16x128xbf16, #tpu.memory_space<vmem>>, vector<16x16x4xbf16>,
    %20 = vector.extract_strided_slice %1 {offsets = [2, 2, 0], sizes = [16, 16, 4], strides = [1, 1, 1]} : vector<18x18x4xbf16> to vector<16x16x4xbf16>
    %c0_22 = arith.constant 0 : index
    %c0_23 = arith.constant 0 : index
    %c32 = arith.constant 32 : index
    %21 = vector.load %arg6[%c0_22, %c0_23, %c32] : memref<16x16x128xbf16, #tpu.memory_space<vmem>>, vector<16x16x4xbf16>
    tpu.vector_store %arg6[%c0_22, %c0_23, %c32], %20 {strides = array<i32>} : memref<16x16x128xbf16, #tpu.memory_space<vmem>>, vector<16x16x4xbf16>,
    %c0_24 = arith.constant 0 : index
    %c0_25 = arith.constant 0 : index
    %c0_26 = arith.constant 0 : index
    %22 = vector.load %arg6[%c0_24, %c0_25, %c0_26] : memref<16x16x128xbf16, #tpu.memory_space<vmem>>, vector<16x16x128xbf16>
    %23 = vector.shape_cast %22 : vector<16x16x128xbf16> to vector<256x128xbf16>
    %c0_27 = arith.constant 0 : index
    %c0_28 = arith.constant 0 : index
    %24 = vector.load %arg2[%c0_27, %c0_28] : memref<128x128xbf16, #tpu.memory_space<vmem>>, vector<128x128xbf16>
    %cst_29 = arith.constant dense<0.000000e+00> : vector<256x128xf32>
    %25 = tpu.matmul %23, %24, %cst_29 {dimension_numbers = #tpu.dot_dimension_numbers<[1], [0], [0], [1], [0, 0, 1, 1], [], []>} : vector<256x128xbf16>, vector<128x128xbf16>, vector<256x128xf32> -> vector<256x128xf32>
    %26 = arith.index_cast %arg0 : i32 to index
    %c0_30 = arith.constant 0 : index
    %c0_31 = arith.constant 0 : index
    %27 = vector.load %arg5[%26, %c0_30, %c0_31] : memref<2x256x128xf32, #tpu.memory_space<vmem>>, vector<1x256x128xf32>
    %28 = vector.shape_cast %27 : vector<1x256x128xf32> to vector<256x128xf32>
    %29 = vector.shape_cast %25 : vector<256x128xf32> to vector<1x256x128xf32>
    tpu.vector_store %arg5[%26, %c0_30, %c0_31], %29 {strides = array<i32>} : memref<2x256x128xf32, #tpu.memory_space<vmem>>, vector<1x256x128xf32>,
    %c0_i32 = arith.constant 0 : i32
    %30 = arith.cmpi eq, %arg0, %c0_i32 : i32
    %31 = arith.extui %30 : i1 to i32
    %c0_i32_32 = arith.constant 0 : i32
    %32 = arith.cmpi ne, %31, %c0_i32_32 : i32
    scf.if %32 {
      %cst_46 = arith.constant dense<0.000000e+00> : vector<128xf32>
      %50 = vector.multi_reduction <add>, %25, %cst_46 [0] : vector<256x128xf32> to vector<128xf32>
      %51 = vector.shape_cast %50 : vector<128xf32> to vector<1x128xf32>
      %cst_47 = arith.constant 3.906250e-03 : f32
      %52 = vector.broadcast %cst_47 : f32 to vector<1x128xf32>
      %53 = arith.mulf %51, %52 : vector<1x128xf32>
      %c0_48 = arith.constant 0 : index
      %c0_49 = arith.constant 0 : index
      %54 = vector.load %arg9[%c0_48, %c0_49] : memref<1x128xf32, #tpu.memory_space<vmem>>, vector<1x128xf32>
      tpu.vector_store %arg9[%c0_48, %c0_49], %53 {strides = array<i32>} : memref<1x128xf32, #tpu.memory_space<vmem>>, vector<1x128xf32>,
      %cst_50 = arith.constant 0.000000e+00 : f32
      %55 = vector.broadcast %cst_50 : f32 to vector<1x128xf32>
      %c0_51 = arith.constant 0 : index
      %c0_52 = arith.constant 0 : index
      %56 = vector.load %arg7[%c0_51, %c0_52] : memref<1x128xf32, #tpu.memory_space<vmem>>, vector<1x128xf32>
      tpu.vector_store %arg7[%c0_51, %c0_52], %55 {strides = array<i32>} : memref<1x128xf32, #tpu.memory_space<vmem>>, vector<1x128xf32>,
      %cst_53 = arith.constant 0.000000e+00 : f32
      %57 = vector.broadcast %cst_53 : f32 to vector<1x128xf32>
      %c0_54 = arith.constant 0 : index
      %c0_55 = arith.constant 0 : index
      %58 = vector.load %arg8[%c0_54, %c0_55] : memref<1x128xf32, #tpu.memory_space<vmem>>, vector<1x128xf32>
      tpu.vector_store %arg8[%c0_54, %c0_55], %57 {strides = array<i32>} : memref<1x128xf32, #tpu.memory_space<vmem>>, vector<1x128xf32>,
    } else {
    }
    %c0_33 = arith.constant 0 : index
    %c0_34 = arith.constant 0 : index
    %33 = vector.load %arg9[%c0_33, %c0_34] : memref<1x128xf32, #tpu.memory_space<vmem>>, vector<1x128xf32>
    %34 = vector.broadcast %33 : vector<1x128xf32> to vector<256x128xf32>
    %35 = arith.subf %25, %34 : vector<256x128xf32>
    %c0_35 = arith.constant 0 : index
    %c0_36 = arith.constant 0 : index
    %36 = vector.load %arg7[%c0_35, %c0_36] : memref<1x128xf32, #tpu.memory_space<vmem>>, vector<1x128xf32>
    %cst_37 = arith.constant dense<0.000000e+00> : vector<128xf32>
    %37 = vector.multi_reduction <add>, %35, %cst_37 [0] : vector<256x128xf32> to vector<128xf32>
    %38 = vector.shape_cast %37 : vector<128xf32> to vector<1x128xf32>
    %39 = arith.addf %36, %38 : vector<1x128xf32>
    %c0_38 = arith.constant 0 : index
    %c0_39 = arith.constant 0 : index
    %40 = vector.load %arg7[%c0_38, %c0_39] : memref<1x128xf32, #tpu.memory_space<vmem>>, vector<1x128xf32>
    tpu.vector_store %arg7[%c0_38, %c0_39], %39 {strides = array<i32>} : memref<1x128xf32, #tpu.memory_space<vmem>>, vector<1x128xf32>,
    %c0_40 = arith.constant 0 : index
    %c0_41 = arith.constant 0 : index
    %41 = vector.load %arg8[%c0_40, %c0_41] : memref<1x128xf32, #tpu.memory_space<vmem>>, vector<1x128xf32>
    %42 = arith.mulf %35, %35 : vector<256x128xf32>
    %cst_42 = arith.constant dense<0.000000e+00> : vector<128xf32>
    %43 = vector.multi_reduction <add>, %42, %cst_42 [0] : vector<256x128xf32> to vector<128xf32>
    %44 = vector.shape_cast %43 : vector<128xf32> to vector<1x128xf32>
    %45 = arith.addf %41, %44 : vector<1x128xf32>
    %c0_43 = arith.constant 0 : index
    %c0_44 = arith.constant 0 : index
    %46 = vector.load %arg8[%c0_43, %c0_44] : memref<1x128xf32, #tpu.memory_space<vmem>>, vector<1x128xf32>
    tpu.vector_store %arg8[%c0_43, %c0_44], %45 {strides = array<i32>} : memref<1x128xf32, #tpu.memory_space<vmem>>, vector<1x128xf32>,
    %c1_i32 = arith.constant 1 : i32
    %47 = arith.cmpi eq, %arg0, %c1_i32 : i32
    %48 = arith.extui %47 : i1 to i32
    %c0_i32_45 = arith.constant 0 : i32
    %49 = arith.cmpi ne, %48, %c0_i32_45 : i32
    scf.if %49 {
      %c0_46 = arith.constant 0 : index
      %c0_47 = arith.constant 0 : index
      %50 = vector.load %arg7[%c0_46, %c0_47] : memref<1x128xf32, #tpu.memory_space<vmem>>, vector<1x128xf32>
      %cst_48 = arith.constant 0.001953125 : f32
      %51 = vector.broadcast %cst_48 : f32 to vector<1x128xf32>
      %52 = arith.mulf %50, %51 : vector<1x128xf32>
      %c0_49 = arith.constant 0 : index
      %c0_50 = arith.constant 0 : index
      %53 = vector.load %arg9[%c0_49, %c0_50] : memref<1x128xf32, #tpu.memory_space<vmem>>, vector<1x128xf32>
      %54 = arith.addf %52, %53 : vector<1x128xf32>
      %c0_51 = arith.constant 0 : index
      %c0_52 = arith.constant 0 : index
      %55 = vector.load %arg8[%c0_51, %c0_52] : memref<1x128xf32, #tpu.memory_space<vmem>>, vector<1x128xf32>
      %cst_53 = arith.constant 0.001953125 : f32
      %56 = vector.broadcast %cst_53 : f32 to vector<1x128xf32>
      %57 = arith.mulf %55, %56 : vector<1x128xf32>
      %58 = arith.mulf %52, %52 : vector<1x128xf32>
      %59 = arith.subf %57, %58 : vector<1x128xf32>
      %cst_54 = arith.constant 0.000000e+00 : f32
      %60 = vector.broadcast %cst_54 : f32 to vector<1x128xf32>
      %61 = arith.maximumf %59, %60 : vector<1x128xf32>
      %c0_55 = arith.constant 0 : index
      %c0_56 = arith.constant 0 : index
      %62 = vector.load %arg3[%c0_55, %c0_56] : memref<1x128xf32, #tpu.memory_space<vmem>>, vector<1x128xf32>
      %cst_57 = arith.constant 9.99999974E-6 : f32
      %63 = vector.broadcast %cst_57 : f32 to vector<1x128xf32>
      %64 = arith.addf %61, %63 : vector<1x128xf32>
      %65 = math.rsqrt %64 : vector<1x128xf32>
      %66 = arith.mulf %62, %65 : vector<1x128xf32>
      %c0_58 = arith.constant 0 : index
      %c0_59 = arith.constant 0 : index
      %67 = vector.load %arg4[%c0_58, %c0_59] : memref<1x128xf32, #tpu.memory_space<vmem>>, vector<1x128xf32>
      %68 = arith.mulf %54, %66 : vector<1x128xf32>
      %69 = arith.subf %67, %68 : vector<1x128xf32>
      %c0_i32_60 = arith.constant 0 : i32
      %c2_i32 = arith.constant 2 : i32
      %70 = arith.addi %c0_i32_60, %c2_i32 : i32
      %c1_i32_61 = arith.constant 1 : i32
      scf.for %arg10 = %c0_i32_60 to %70 step %c1_i32_61  : i32 {
        %71 = arith.index_cast %arg10 : i32 to index
        %c0_63 = arith.constant 0 : index
        %c0_64 = arith.constant 0 : index
        %72 = vector.load %arg5[%71, %c0_63, %c0_64] : memref<2x256x128xf32, #tpu.memory_space<vmem>>, vector<1x256x128xf32>
        %73 = vector.shape_cast %72 : vector<1x256x128xf32> to vector<256x128xf32>
        %74 = vector.broadcast %66 : vector<1x128xf32> to vector<256x128xf32>
        %75 = arith.mulf %73, %74 : vector<256x128xf32>
        %76 = vector.broadcast %69 : vector<1x128xf32> to vector<256x128xf32>
        %77 = arith.addf %75, %76 : vector<256x128xf32>
        %cst_65 = arith.constant 0.000000e+00 : f32
        %78 = vector.broadcast %cst_65 : f32 to vector<256x128xf32>
        %79 = arith.cmpf oge, %77, %78 : vector<256x128xf32>
        %cst_66 = arith.constant 0.00999999977 : f32
        %80 = vector.broadcast %cst_66 : f32 to vector<256x128xf32>
        %81 = arith.mulf %80, %77 : vector<256x128xf32>
        %82 = arith.select %79, %77, %81 : vector<256x128xi1>, vector<256x128xf32>
        %83 = arith.index_cast %arg10 : i32 to index
        %c0_67 = arith.constant 0 : index
        %c0_68 = arith.constant 0 : index
        %84 = vector.load %arg5[%83, %c0_67, %c0_68] : memref<2x256x128xf32, #tpu.memory_space<vmem>>, vector<1x256x128xf32>
        %85 = vector.shape_cast %84 : vector<1x256x128xf32> to vector<256x128xf32>
        %86 = vector.shape_cast %82 : vector<256x128xf32> to vector<1x256x128xf32>
        tpu.vector_store %arg5[%83, %c0_67, %c0_68], %86 {strides = array<i32>} : memref<2x256x128xf32, #tpu.memory_space<vmem>>, vector<1x256x128xf32>,
      }
      %c2_i32_62 = arith.constant 2 : i32
    } else {
    }
    return
  }
  func.func @transform_0(%arg0: i32) -> (i32, i32, i32, i32) {
    %c0_i32 = arith.constant 0 : i32
    %c0_i32_0 = arith.constant 0 : i32
    %c0_i32_1 = arith.constant 0 : i32
    %c0_i32_2 = arith.constant 0 : i32
    return %arg0, %c0_i32, %c0_i32_0, %c0_i32_1 : i32, i32, i32, i32
  }
  func.func @transform_1(%arg0: i32) -> (i32, i32) {
    %c0_i32 = arith.constant 0 : i32
    %c0_i32_0 = arith.constant 0 : i32
    %c0_i32_1 = arith.constant 0 : i32
    return %c0_i32, %c0_i32_0 : i32, i32
  }
  func.func @transform_2(%arg0: i32) -> (i32, i32) {
    %c0_i32 = arith.constant 0 : i32
    %c0_i32_0 = arith.constant 0 : i32
    %c0_i32_1 = arith.constant 0 : i32
    return %c0_i32, %c0_i32_0 : i32, i32
  }
  func.func @transform_3(%arg0: i32) -> (i32, i32) {
    %c0_i32 = arith.constant 0 : i32
    %c0_i32_0 = arith.constant 0 : i32
    %c0_i32_1 = arith.constant 0 : i32
    return %c0_i32, %c0_i32_0 : i32, i32
  }
  func.func @transform_4(%arg0: i32) -> (i32, i32, i32) {
    %c0_i32 = arith.constant 0 : i32
    %c0_i32_0 = arith.constant 0 : i32
    %c0_i32_1 = arith.constant 0 : i32
    %c0_i32_2 = arith.constant 0 : i32
    return %c0_i32, %c0_i32_0, %c0_i32_1 : i32, i32, i32
  }
}

</mosaic_0001>

<llo_original>
// kernel: conv_bn_act.1
$region0: #{conv_bn_act.1}
  #allocation0 [shape = 'u32[]', space=smem, size = 0x4, offset = 0x4, fixed_abs, tag = 'smem constant byte address 0x4 - core index']
  #allocation1 [shape = 'u32[144,128]{1,0:T(1,128)}', space=vmem, size = 0x12000, scoped, tag = 'internal scratch']
  #allocation2 [shape = 'bf16[16,16,128]{2,1,0:T(8,128)(2,1)}', space=vmem, size = 0x10000, scoped, tag = 'scratch operand']
  #allocation3 [shape = 'f32[1,128]{1,0:T(1,128)}', space=vmem, size = 0x200, scoped, tag = 'scratch operand']
  #allocation4 [shape = 'f32[1,128]{1,0:T(1,128)}', space=vmem, size = 0x200, scoped, tag = 'scratch operand']
  #allocation5 [shape = 'f32[1,128]{1,0:T(1,128)}', space=vmem, size = 0x200, scoped, tag = 'scratch operand']
  %s0 = inlined_call_operand.vmem [shape: bf16[2,18,18,4], index: 0, kind: input, shape index: {}]
  %s1 = inlined_call_operand.vmem [shape: bf16[128,128], index: 1, kind: input, shape index: {}]
  %s2 = inlined_call_operand.vmem [shape: f32[1,128], index: 2, kind: input, shape index: {}]
  %s3 = inlined_call_operand.vmem [shape: f32[1,128], index: 3, kind: input, shape index: {}]
  %s4 = inlined_call_operand.vmem [shape: f32[2,256,128], index: 4, kind: output, shape index: {}]
  %s5 = sld [smem:[#allocation0]]
  $region64: #{conv_bn_act.1} parent=0
    _
  %s7 = ssub.s32 1, %s5
  %s8 = scalar_select 0, %s7, %s5
  loop: start=0, step=1, limit=4
  $region2: #{conv_bn_act.1} parent=0 // loop_pre_header
    _
  $region3: #{conv_bn_act.1} parent=0 // loop_header
    %s10 = sphi 0, %s14
    %p11 = scmp.ge.s32.totalorder %s10, 4
    %s20 = sphi 0, %s22
    %s23 = sphi 0, %s20
    %s24 = sphi 0, %s23
    %s40 = sphi 0, %s24
    %s44 = sphi 0, %s44
    %s46 = sphi 0, %s44
    %s47 = sphi 0, %s46
    %s61 = sphi 0, %s47
    %s65 = sphi 0, %s65
    %s67 = sphi 0, %s65
    %s68 = sphi 0, %s67
    %s82 = sphi 0, %s68
    %s86 = sphi 0, %s86
    %s88 = sphi 0, %s86
    %s89 = sphi 0, %s88
    %s103 = sphi 0, %s89
    %s107 = sphi 0, %s107
    %s109 = sphi 0, %s107
    %s110 = sphi 0, %s109
    %s124 = sphi 0, %s110
  $region4: #{conv_bn_act.1} parent=0 // loop_header_branch
    %13 = sbr.rel (%p11) target = $region8
  $region5: #{conv_bn_act.1} parent=0 // loop_body
    %s15 = ssub.s32 %s10, 1
    %s16 = ssub.s32 %s10, 2
    %s17 = sadd.s32 %s10, 1
    %s18 = ssub.s32 %s10, %s17
    %p19 = scmp.eq.s32.totalorder %s18, 0
    %s21 = sadd.s32 %s20, 1
    %s22 = scalar_select %p19, %s20, %s21
    %p25 = pneg %p19
    %p26 = scmp.eq.s32.totalorder %s10, 1
    %p27 = por %p25, %p26
    %p28 = scmp.ne.s32.totalorder %s20, %s23
    %p29 = scmp.eq.s32.totalorder %s10, 0
    %p30 = por %p28, %p29
    %p31 = scmp.ne.s32.totalorder %s20, %s23
    %p32 = scmp.eq.s32.totalorder %s15, 1
    %p33 = por %p31, %p32
    %p34 = scmp.ne.s32.totalorder %s23, %s24
    %p35 = scmp.eq.s32.totalorder %s15, 0
    %p36 = por %p34, %p35
    %p37 = scmp.ne.s32.totalorder %s23, %s24
    %p38 = scmp.eq.s32.totalorder %s16, 1
    %p39 = por %p37, %p38
    %p41 = scmp.ne.s32.totalorder %s24, %s40
    %p42 = scmp.eq.s32.totalorder %s16, 0
    %p43 = por %p41, %p42
    %s45 = sadd.s32 %s44, 1
    %p48 = scmp.eq.s32.totalorder %s10, 1
    %p49 = scmp.ne.s32.totalorder %s44, %s46
    %p50 = scmp.eq.s32.totalorder %s10, 0
    %p51 = por %p49, %p50
    %p52 = scmp.ne.s32.totalorder %s44, %s46
    %p53 = scmp.eq.s32.totalorder %s15, 1
    %p54 = por %p52, %p53
    %p55 = scmp.ne.s32.totalorder %s46, %s47
    %p56 = scmp.eq.s32.totalorder %s15, 0
    %p57 = por %p55, %p56
    %p58 = scmp.ne.s32.totalorder %s46, %s47
    %p59 = scmp.eq.s32.totalorder %s16, 1
    %p60 = por %p58, %p59
    %p62 = scmp.ne.s32.totalorder %s47, %s61
    %p63 = scmp.eq.s32.totalorder %s16, 0
    %p64 = por %p62, %p63
    %s66 = sadd.s32 %s65, 1
    %p69 = scmp.eq.s32.totalorder %s10, 1
    %p70 = scmp.ne.s32.totalorder %s65, %s67
    %p71 = scmp.eq.s32.totalorder %s10, 0
    %p72 = por %p70, %p71
    %p73 = scmp.ne.s32.totalorder %s65, %s67
    %p74 = scmp.eq.s32.totalorder %s15, 1
    %p75 = por %p73, %p74
    %p76 = scmp.ne.s32.totalorder %s67, %s68
    %p77 = scmp.eq.s32.totalorder %s15, 0
    %p78 = por %p76, %p77
    %p79 = scmp.ne.s32.totalorder %s67, %s68
    %p80 = scmp.eq.s32.totalorder %s16, 1
    %p81 = por %p79, %p80
    %p83 = scmp.ne.s32.totalorder %s68, %s82
    %p84 = scmp.eq.s32.totalorder %s16, 0
    %p85 = por %p83, %p84
    %s87 = sadd.s32 %s86, 1
    %p90 = scmp.eq.s32.totalorder %s10, 1
    %p91 = scmp.ne.s32.totalorder %s86, %s88
    %p92 = scmp.eq.s32.totalorder %s10, 0
    %p93 = por %p91, %p92
    %p94 = scmp.ne.s32.totalorder %s86, %s88
    %p95 = scmp.eq.s32.totalorder %s15, 1
    %p96 = por %p94, %p95
    %p97 = scmp.ne.s32.totalorder %s88, %s89
    %p98 = scmp.eq.s32.totalorder %s15, 0
    %p99 = por %p97, %p98
    %p100 = scmp.ne.s32.totalorder %s88, %s89
    %p101 = scmp.eq.s32.totalorder %s16, 1
    %p102 = por %p100, %p101
    %p104 = scmp.ne.s32.totalorder %s89, %s103
    %p105 = scmp.eq.s32.totalorder %s16, 0
    %p106 = por %p104, %p105
    %s108 = sadd.s32 %s107, 1
    %p111 = scmp.eq.s32.totalorder %s10, 1
    %p112 = scmp.ne.s32.totalorder %s107, %s109
    %p113 = scmp.eq.s32.totalorder %s10, 0
    %p114 = por %p112, %p113
    %p115 = scmp.ne.s32.totalorder %s107, %s109
    %p116 = scmp.eq.s32.totalorder %s15, 1
    %p117 = por %p115, %p116
    %p118 = scmp.ne.s32.totalorder %s109, %s110
    %p119 = scmp.eq.s32.totalorder %s15, 0
    %p120 = por %p118, %p119
    %p121 = scmp.ne.s32.totalorder %s109, %s110
    %p122 = scmp.eq.s32.totalorder %s16, 1
    %p123 = por %p121, %p122
    %p125 = scmp.ne.s32.totalorder %s110, %s124
    %p126 = scmp.eq.s32.totalorder %s16, 0
    %p127 = por %p125, %p126
    %p128 = scmp.le.s32.totalorder 1, %s10
    %p129 = scmp.lt.s32.totalorder %s10, 3
    %p130 = pnand %p128, %p129
    %p131 = pneg %p130
    // Predicated region
    $region9: #{conv_bn_act.1} parent=5 // pred_check
      _
    $region10: #{conv_bn_act.1} parent=5 // pred_check_branch
      %133 = sbr.rel (%p130) target = $region12
    $region11: #{conv_bn_act.1} parent=5 // pred_region
      %s134 = ssub.s32 %s10, 1
      // Predicated region
      $region13: #{conv_bn_act.1} parent=11 // pred_check
        %p135 = pneg %p57
      $region14: #{conv_bn_act.1} parent=11 // pred_check_branch
        %137 = sbr.rel (%p135) target = $region16
      $region15: #{conv_bn_act.1} parent=11 // pred_region
        _
      $region16: #{conv_bn_act.1} parent=11 // pred_fallthru
        _
      // Predicated region
      $region17: #{conv_bn_act.1} parent=11 // pred_check
        %p138 = pneg %p78
      $region18: #{conv_bn_act.1} parent=11 // pred_check_branch
        %140 = sbr.rel (%p138) target = $region20
      $region19: #{conv_bn_act.1} parent=11 // pred_region
        _
      $region20: #{conv_bn_act.1} parent=11 // pred_fallthru
        _
      // Predicated region
      $region21: #{conv_bn_act.1} parent=11 // pred_check
        %p141 = pneg %p99
      $region22: #{conv_bn_act.1} parent=11 // pred_check_branch
        %143 = sbr.rel (%p141) target = $region24
      $region23: #{conv_bn_act.1} parent=11 // pred_region
        _
      $region24: #{conv_bn_act.1} parent=11 // pred_fallthru
        _
    $region12: #{conv_bn_act.1} parent=5 // pred_fallthru
      _
    %p144 = scmp.lt.s32.totalorder %s10, 2
    // Predicated region
    $region25: #{conv_bn_act.1} parent=5 // pred_check
      %p145 = pneg %p144
    $region26: #{conv_bn_act.1} parent=5 // pred_check_branch
      %147 = sbr.rel (%p145) target = $region28
    $region27: #{conv_bn_act.1} parent=5 // pred_region
      // Predicated region
      $region29: #{conv_bn_act.1} parent=27 // pred_check
        %p148 = pneg %p30
      $region30: #{conv_bn_act.1} parent=27 // pred_check_branch
        %150 = sbr.rel (%p148) target = $region32
      $region31: #{conv_bn_act.1} parent=27 // pred_region
        %p151 = scmp.lt.s32.totalorder %s10, 1
        %s152 = scalar_select %p151, %s10, 1
        %s153 = smul.addr %s152, 54
        %s154 = smul.addr %s153, 4
        %s155 = scalar_lea.vmem %s0, %s154
      $region32: #{conv_bn_act.1} parent=27 // pred_fallthru
        _
    $region28: #{conv_bn_act.1} parent=5 // pred_fallthru
      _
    %p156 = scmp.le.s32.totalorder 1, %s10
    %p157 = scmp.lt.s32.totalorder %s10, 3
    %p158 = pnand %p156, %p157
    %p159 = pneg %p158
    // Predicated region
    $region33: #{conv_bn_act.1} parent=5 // pred_check
      _
    $region34: #{conv_bn_act.1} parent=5 // pred_check_branch
      %161 = sbr.rel (%p158) target = $region36
    $region35: #{conv_bn_act.1} parent=5 // pred_region
      %s162 = ssub.s32 %s10, 1
      %p163 = scmp.lt.s32.totalorder %s15, 1
      %s164 = scalar_select %p163, %s15, 1
      %s165 = smul.addr %s164, 54
      %s166 = smul.addr %s165, 4
      %s167 = scalar_lea.vmem %s0, %s166
      %p168 = pneg %p36
      %p169 = pneg %p33
      %p170 = pneg %p57
      %p171 = pneg %p54
      %p172 = pneg %p78
      %p173 = pneg %p75
      %p174 = pneg %p99
      %p175 = pneg %p96
      %p176 = pneg %p120
      %p177 = pneg %p117
      %p178 = scmp.lt.s32.totalorder %s15, 1
      %s179 = scalar_select %p178, %s15, 1
      %s180 = smul.addr %s179, 54
      %s181 = smul.addr %s180, 4
      %s182 = scalar_lea.vmem %s0, %s181
      %v184 = vld [vmem:[%s182] sm:$0xf]
      %v185 = vld [vmem:[%s182 + $0x4] sm:$0xf]
      %v186 = vld [vmem:[%s182 + $0x8] sm:$0x1]
      %v187 = vld [vmem:[%s182 + $0xc] sm:$0xf]
      %v188 = vld [vmem:[%s182 + $0x10] sm:$0xf]
      %v189 = vld [vmem:[%s182 + $0x14] sm:$0x1]
      %v190 = vld [vmem:[%s182 + $0x18] sm:$0xf]
      %v191 = vld [vmem:[%s182 + $0x1c] sm:$0xf]
      %v192 = vld [vmem:[%s182 + $0x20] sm:$0x1]
      %v193 = vld [vmem:[%s182 + $0x24] sm:$0xf]
      %v194 = vld [vmem:[%s182 + $0x28] sm:$0xf]
      %v195 = vld [vmem:[%s182 + $0x2c] sm:$0x1]
      %v196 = vld [vmem:[%s182 + $0x30] sm:$0xf]
      %v197 = vld [vmem:[%s182 + $0x34] sm:$0xf]
      %v198 = vld [vmem:[%s182 + $0x38] sm:$0x1]
      %v199 = vld [vmem:[%s182 + $0x3c] sm:$0xf]
      %v200 = vld [vmem:[%s182 + $0x40] sm:$0xf]
      %v201 = vld [vmem:[%s182 + $0x44] sm:$0x1]
      %v202 = vld [vmem:[%s182 + $0x48] sm:$0xf]
      %v203 = vld [vmem:[%s182 + $0x4c] sm:$0xf]
      %v204 = vld [vmem:[%s182 + $0x50] sm:$0x1]
      %v205 = vld [vmem:[%s182 + $0x54] sm:$0xf]
      %v206 = vld [vmem:[%s182 + $0x58] sm:$0xf]
      %v207 = vld [vmem:[%s182 + $0x5c] sm:$0x1]
      %v208 = vld [vmem:[%s182 + $0x60] sm:$0xf]
      %v209 = vld [vmem:[%s182 + $0x64] sm:$0xf]
      %v210 = vld [vmem:[%s182 + $0x68] sm:$0x1]
      %v211 = vld [vmem:[%s182 + $0x6c] sm:$0xf]
      %v212 = vld [vmem:[%s182 + $0x70] sm:$0xf]
      %v213 = vld [vmem:[%s182 + $0x74] sm:$0x1]
      %v214 = vld [vmem:[%s182 + $0x78] sm:$0xf]
      %v215 = vld [vmem:[%s182 + $0x7c] sm:$0xf]
      %v216 = vld [vmem:[%s182 + $0x80] sm:$0x1]
      %v217 = vld [vmem:[%s182 + $0x84] sm:$0xf]
      %v218 = vld [vmem:[%s182 + $0x88] sm:$0xf]
      %v219 = vld [vmem:[%s182 + $0x8c] sm:$0x1]
      %v220 = vld [vmem:[%s182 + $0x90] sm:$0xf]
      %v221 = vld [vmem:[%s182 + $0x94] sm:$0xf]
      %v222 = vld [vmem:[%s182 + $0x98] sm:$0x1]
      %v223 = vld [vmem:[%s182 + $0x9c] sm:$0xf]
      %v224 = vld [vmem:[%s182 + $0xa0] sm:$0xf]
      %v225 = vld [vmem:[%s182 + $0xa4] sm:$0x1]
      %v226 = vld [vmem:[%s182 + $0xa8] sm:$0xf]
      %v227 = vld [vmem:[%s182 + $0xac] sm:$0xf]
      %v228 = vld [vmem:[%s182 + $0xb0] sm:$0x1]
      %v229 = vld [vmem:[%s182 + $0xb4] sm:$0xf]
      %v230 = vld [vmem:[%s182 + $0xb8] sm:$0xf]
      %v231 = vld [vmem:[%s182 + $0xbc] sm:$0x1]
      %v232 = vld [vmem:[%s182 + $0xc0] sm:$0xf]
      %v233 = vld [vmem:[%s182 + $0xc4] sm:$0xf]
      %v234 = vld [vmem:[%s182 + $0xc8] sm:$0x1]
      %v235 = vld [vmem:[%s182 + $0xcc] sm:$0xf]
      %v236 = vld [vmem:[%s182 + $0xd0] sm:$0xf]
      %v237 = vld [vmem:[%s182 + $0xd4] sm:$0x1]
      %vm238 = vcmask 1043744
      %239 = vst.msk [vmem:[#allocation2] sm:$0xf] %vm238, 0
      %240 = vst.msk [vmem:[#allocation2 + $0x4] sm:$0xf] %vm238, 0
      %241 = vst.msk [vmem:[#allocation2 + $0x8] sm:$0xf] %vm238, 0
      %242 = vst.msk [vmem:[#allocation2 + $0xc] sm:$0xf] %vm238, 0
      %243 = vst.msk [vmem:[#allocation2 + $0x10] sm:$0xf] %vm238, 0
      %244 = vst.msk [vmem:[#allocation2 + $0x14] sm:$0xf] %vm238, 0
      %245 = vst.msk [vmem:[#allocation2 + $0x18] sm:$0xf] %vm238, 0
      %246 = vst.msk [vmem:[#allocation2 + $0x1c] sm:$0xf] %vm238, 0
      %247 = vst.msk [vmem:[#allocation2 + $0x20] sm:$0xf] %vm238, 0
      %248 = vst.msk [vmem:[#allocation2 + $0x24] sm:$0xf] %vm238, 0
      %249 = vst.msk [vmem:[#allocation2 + $0x28] sm:$0xf] %vm238, 0
      %250 = vst.msk [vmem:[#allocation2 + $0x2c] sm:$0xf] %vm238, 0
      %251 = vst.msk [vmem:[#allocation2 + $0x30] sm:$0xf] %vm238, 0
      %252 = vst.msk [vmem:[#allocation2 + $0x34] sm:$0xf] %vm238, 0
      %253 = vst.msk [vmem:[#allocation2 + $0x38] sm:$0xf] %vm238, 0
      %254 = vst.msk [vmem:[#allocation2 + $0x3c] sm:$0xf] %vm238, 0
      %255 = vst.msk [vmem:[#allocation2 + $0x40] sm:$0xf] %vm238, 0
      %256 = vst.msk [vmem:[#allocation2 + $0x44] sm:$0xf] %vm238, 0
      %257 = vst.msk [vmem:[#allocation2 + $0x48] sm:$0xf] %vm238, 0
      %258 = vst.msk [vmem:[#allocation2 + $0x4c] sm:$0xf] %vm238, 0
      %259 = vst.msk [vmem:[#allocation2 + $0x50] sm:$0xf] %vm238, 0
      %260 = vst.msk [vmem:[#allocation2 + $0x54] sm:$0xf] %vm238, 0
      %261 = vst.msk [vmem:[#allocation2 + $0x58] sm:$0xf] %vm238, 0
      %262 = vst.msk [vmem:[#allocation2 + $0x5c] sm:$0xf] %vm238, 0
      %263 = vst.msk [vmem:[#allocation2 + $0x60] sm:$0xf] %vm238, 0
      %264 = vst.msk [vmem:[#allocation2 + $0x64] sm:$0xf] %vm238, 0
      %265 = vst.msk [vmem:[#allocation2 + $0x68] sm:$0xf] %vm238, 0
      %266 = vst.msk [vmem:[#allocation2 + $0x6c] sm:$0xf] %vm238, 0
      %267 = vst.msk [vmem:[#allocation2 + $0x70] sm:$0xf] %vm238, 0
      %268 = vst.msk [vmem:[#allocation2 + $0x74] sm:$0xf] %vm238, 0
      %269 = vst.msk [vmem:[#allocation2 + $0x78] sm:$0xf] %vm238, 0
      %270 = vst.msk [vmem:[#allocation2 + $0x7c] sm:$0xf] %vm238, 0
      %vm271 = vcmask 27648
      %272 = vst.msk [vmem:[#allocation2] sm:$0xf] %vm271, %v184
      %273 = vst.msk [vmem:[#allocation2 + $0x4] sm:$0xf] %vm271, %v185
      %274 = vst.msk [vmem:[#allocation2 + $0x8] sm:$0xf] %vm271, %v187
      %275 = vst.msk [vmem:[#allocation2 + $0xc] sm:$0xf] %vm271, %v188
      %276 = vst.msk [vmem:[#allocation2 + $0x10] sm:$0xf] %vm271, %v190
      %277 = vst.msk [vmem:[#allocation2 + $0x14] sm:$0xf] %vm271, %v191
      %278 = vst.msk [vmem:[#allocation2 + $0x18] sm:$0xf] %vm271, %v193
      %279 = vst.msk [vmem:[#allocation2 + $0x1c] sm:$0xf] %vm271, %v194
      %280 = vst.msk [vmem:[#allocation2 + $0x20] sm:$0xf] %vm271, %v196
      %281 = vst.msk [vmem:[#allocation2 + $0x24] sm:$0xf] %vm271, %v197
      %282 = vst.msk [vmem:[#allocation2 + $0x28] sm:$0xf] %vm271, %v199
      %283 = vst.msk [vmem:[#allocation2 + $0x2c] sm:$0xf] %vm271, %v200
      %284 = vst.msk [vmem:[#allocation2 + $0x30] sm:$0xf] %vm271, %v202
      %285 = vst.msk [vmem:[#allocation2 + $0x34] sm:$0xf] %vm271, %v203
      %286 = vst.msk [vmem:[#allocation2 + $0x38] sm:$0xf] %vm271, %v205
      %287 = vst.msk [vmem:[#allocation2 + $0x3c] sm:$0xf] %vm271, %v206
      %288 = vst.msk [vmem:[#allocation2 + $0x40] sm:$0xf] %vm271, %v208
      %289 = vst.msk [vmem:[#allocation2 + $0x44] sm:$0xf] %vm271, %v209
      %290 = vst.msk [vmem:[#allocation2 + $0x48] sm:$0xf] %vm271, %v211
      %291 = vst.msk [vmem:[#allocation2 + $0x4c] sm:$0xf] %vm271, %v212
      %292 = vst.msk [vmem:[#allocation2 + $0x50] sm:$0xf] %vm271, %v214
      %293 = vst.msk [vmem:[#allocation2 + $0x54] sm:$0xf] %vm271, %v215
      %294 = vst.msk [vmem:[#allocation2 + $0x58] sm:$0xf] %vm271, %v217
      %295 = vst.msk [vmem:[#allocation2 + $0x5c] sm:$0xf] %vm271, %v218
      %296 = vst.msk [vmem:[#allocation2 + $0x60] sm:$0xf] %vm271, %v220
      %297 = vst.msk [vmem:[#allocation2 + $0x64] sm:$0xf] %vm271, %v221
      %298 = vst.msk [vmem:[#allocation2 + $0x68] sm:$0xf] %vm271, %v223
      %299 = vst.msk [vmem:[#allocation2 + $0x6c] sm:$0xf] %vm271, %v224
      %300 = vst.msk [vmem:[#allocation2 + $0x70] sm:$0xf] %vm271, %v226
      %301 = vst.msk [vmem:[#allocation2 + $0x74] sm:$0xf] %vm271, %v227
      %302 = vst.msk [vmem:[#allocation2 + $0x78] sm:$0xf] %vm271, %v229
      %303 = vst.msk [vmem:[#allocation2 + $0x7c] sm:$0xf] %vm271, %v230
      %vm304 = vsmask.f32 3328
      %vm305 = vsmask.f32 7440
      %vm306 = vmor %vm304, %vm305
      %v308 = vshrl.u32 %v184, 16
      %v310 = vrot.slane %v308, 4
      %v311 = vshll.u32 %v184, 16
      %v313 = vrot.slane %v311, 5
      %v314 = vor.u32 %v310, %v313
      %v315 = vrot.slane %v314, 4
      %v317 = vshll.u32 %v185, 16
      %v319 = vrot.slane %v317, 5
      %v320 = vsel %vm306, %v315, %v319
      %v321 = vshrl.u32 %v185, 16
      %v323 = vrot.slane %v321, 4
      %v324 = vor.u32 %v323, %v319
      %v325 = vrot.slane %v324, 4
      %v327 = vshll.u32 %v186, 16
      %v329 = vrot.slane %v327, 5
      %v330 = vsel %vm306, %v325, %v329
      %v332 = vshrl.u32 %v187, 16
      %v334 = vrot.slane %v332, 4
      %v335 = vshll.u32 %v187, 16
      %v337 = vrot.slane %v335, 5
      %v338 = vor.u32 %v334, %v337
      %v339 = vrot.slane %v338, 4
      %v341 = vshll.u32 %v188, 16
      %v343 = vrot.slane %v341, 5
      %v344 = vsel %vm306, %v339, %v343
      %v345 = vshrl.u32 %v188, 16
      %v347 = vrot.slane %v345, 4
      %v348 = vor.u32 %v347, %v343
      %v349 = vrot.slane %v348, 4
      %v351 = vshll.u32 %v189, 16
      %v353 = vrot.slane %v351, 5
      %v354 = vsel %vm306, %v349, %v353
      %v356 = vshrl.u32 %v190, 16
      %v358 = vrot.slane %v356, 4
      %v359 = vshll.u32 %v190, 16
      %v361 = vrot.slane %v359, 5
      %v362 = vor.u32 %v358, %v361
      %v363 = vrot.slane %v362, 4
      %v365 = vshll.u32 %v191, 16
      %v367 = vrot.slane %v365, 5
      %v368 = vsel %vm306, %v363, %v367
      %v369 = vshrl.u32 %v191, 16
      %v371 = vrot.slane %v369, 4
      %v372 = vor.u32 %v371, %v367
      %v373 = vrot.slane %v372, 4
      %v375 = vshll.u32 %v192, 16
      %v377 = vrot.slane %v375, 5
      %v378 = vsel %vm306, %v373, %v377
      %v380 = vshrl.u32 %v193, 16
      %v382 = vrot.slane %v380, 4
      %v383 = vshll.u32 %v193, 16
      %v385 = vrot.slane %v383, 5
      %v386 = vor.u32 %v382, %v385
      %v387 = vrot.slane %v386, 4
      %v389 = vshll.u32 %v194, 16
      %v391 = vrot.slane %v389, 5
      %v392 = vsel %vm306, %v387, %v391
      %v393 = vshrl.u32 %v194, 16
      %v395 = vrot.slane %v393, 4
      %v396 = vor.u32 %v395, %v391
      %v397 = vrot.slane %v396, 4
      %v399 = vshll.u32 %v195, 16
      %v401 = vrot.slane %v399, 5
      %v402 = vsel %vm306, %v397, %v401
      %v404 = vshrl.u32 %v196, 16
      %v406 = vrot.slane %v404, 4
      %v407 = vshll.u32 %v196, 16
      %v409 = vrot.slane %v407, 5
      %v410 = vor.u32 %v406, %v409
      %v411 = vrot.slane %v410, 4
      %v413 = vshll.u32 %v197, 16
      %v415 = vrot.slane %v413, 5
      %v416 = vsel %vm306, %v411, %v415
      %v417 = vshrl.u32 %v197, 16
      %v419 = vrot.slane %v417, 4
      %v420 = vor.u32 %v419, %v415
      %v421 = vrot.slane %v420, 4
      %v423 = vshll.u32 %v198, 16
      %v425 = vrot.slane %v423, 5
      %v426 = vsel %vm306, %v421, %v425
      %v428 = vshrl.u32 %v199, 16
      %v430 = vrot.slane %v428, 4
      %v431 = vshll.u32 %v199, 16
      %v433 = vrot.slane %v431, 5
      %v434 = vor.u32 %v430, %v433
      %v435 = vrot.slane %v434, 4
      %v437 = vshll.u32 %v200, 16
      %v439 = vrot.slane %v437, 5
      %v440 = vsel %vm306, %v435, %v439
      %v441 = vshrl.u32 %v200, 16
      %v443 = vrot.slane %v441, 4
      %v444 = vor.u32 %v443, %v439
      %v445 = vrot.slane %v444, 4
      %v447 = vshll.u32 %v201, 16
      %v449 = vrot.slane %v447, 5
      %v450 = vsel %vm306, %v445, %v449
      %v452 = vshrl.u32 %v202, 16
      %v454 = vrot.slane %v452, 4
      %v455 = vshll.u32 %v202, 16
      %v457 = vrot.slane %v455, 5
      %v458 = vor.u32 %v454, %v457
      %v459 = vrot.slane %v458, 4
      %v461 = vshll.u32 %v203, 16
      %v463 = vrot.slane %v461, 5
      %v464 = vsel %vm306, %v459, %v463
      %v465 = vshrl.u32 %v203, 16
      %v467 = vrot.slane %v465, 4
      %v468 = vor.u32 %v467, %v463
      %v469 = vrot.slane %v468, 4
      %v471 = vshll.u32 %v204, 16
      %v473 = vrot.slane %v471, 5
      %v474 = vsel %vm306, %v469, %v473
      %v476 = vshrl.u32 %v205, 16
      %v478 = vrot.slane %v476, 4
      %v479 = vshll.u32 %v205, 16
      %v481 = vrot.slane %v479, 5
      %v482 = vor.u32 %v478, %v481
      %v483 = vrot.slane %v482, 4
      %v485 = vshll.u32 %v206, 16
      %v487 = vrot.slane %v485, 5
      %v488 = vsel %vm306, %v483, %v487
      %v489 = vshrl.u32 %v206, 16
      %v491 = vrot.slane %v489, 4
      %v492 = vor.u32 %v491, %v487
      %v493 = vrot.slane %v492, 4
      %v495 = vshll.u32 %v207, 16
      %v497 = vrot.slane %v495, 5
      %v498 = vsel %vm306, %v493, %v497
      %v500 = vshrl.u32 %v208, 16
      %v502 = vrot.slane %v500, 4
      %v503 = vshll.u32 %v208, 16
      %v505 = vrot.slane %v503, 5
      %v506 = vor.u32 %v502, %v505
      %v507 = vrot.slane %v506, 4
      %v509 = vshll.u32 %v209, 16
      %v511 = vrot.slane %v509, 5
      %v512 = vsel %vm306, %v507, %v511
      %v513 = vshrl.u32 %v209, 16
      %v515 = vrot.slane %v513, 4
      %v516 = vor.u32 %v515, %v511
      %v517 = vrot.slane %v516, 4
      %v519 = vshll.u32 %v210, 16
      %v521 = vrot.slane %v519, 5
      %v522 = vsel %vm306, %v517, %v521
      %v524 = vshrl.u32 %v211, 16
      %v526 = vrot.slane %v524, 4
      %v527 = vshll.u32 %v211, 16
      %v529 = vrot.slane %v527, 5
      %v530 = vor.u32 %v526, %v529
      %v531 = vrot.slane %v530, 4
      %v533 = vshll.u32 %v212, 16
      %v535 = vrot.slane %v533, 5
      %v536 = vsel %vm306, %v531, %v535
      %v537 = vshrl.u32 %v212, 16
      %v539 = vrot.slane %v537, 4
      %v540 = vor.u32 %v539, %v535
      %v541 = vrot.slane %v540, 4
      %v543 = vshll.u32 %v213, 16
      %v545 = vrot.slane %v543, 5
      %v546 = vsel %vm306, %v541, %v545
      %v548 = vshrl.u32 %v214, 16
      %v550 = vrot.slane %v548, 4
      %v551 = vshll.u32 %v214, 16
      %v553 = vrot.slane %v551, 5
      %v554 = vor.u32 %v550, %v553
      %v555 = vrot.slane %v554, 4
      %v557 = vshll.u32 %v215, 16
      %v559 = vrot.slane %v557, 5
      %v560 = vsel %vm306, %v555, %v559
      %v561 = vshrl.u32 %v215, 16
      %v563 = vrot.slane %v561, 4
      %v564 = vor.u32 %v563, %v559
      %v565 = vrot.slane %v564, 4
      %v567 = vshll.u32 %v216, 16
      %v569 = vrot.slane %v567, 5
      %v570 = vsel %vm306, %v565, %v569
      %v572 = vshrl.u32 %v217, 16
      %v574 = vrot.slane %v572, 4
      %v575 = vshll.u32 %v217, 16
      %v577 = vrot.slane %v575, 5
      %v578 = vor.u32 %v574, %v577
      %v579 = vrot.slane %v578, 4
      %v581 = vshll.u32 %v218, 16
      %v583 = vrot.slane %v581, 5
      %v584 = vsel %vm306, %v579, %v583
      %v585 = vshrl.u32 %v218, 16
      %v587 = vrot.slane %v585, 4
      %v588 = vor.u32 %v587, %v583
      %v589 = vrot.slane %v588, 4
      %v591 = vshll.u32 %v219, 16
      %v593 = vrot.slane %v591, 5
      %v594 = vsel %vm306, %v589, %v593
      %v596 = vshrl.u32 %v220, 16
      %v598 = vrot.slane %v596, 4
      %v599 = vshll.u32 %v220, 16
      %v601 = vrot.slane %v599, 5
      %v602 = vor.u32 %v598, %v601
      %v603 = vrot.slane %v602, 4
      %v605 = vshll.u32 %v221, 16
      %v607 = vrot.slane %v605, 5
      %v608 = vsel %vm306, %v603, %v607
      %v609 = vshrl.u32 %v221, 16
      %v611 = vrot.slane %v609, 4
      %v612 = vor.u32 %v611, %v607
      %v613 = vrot.slane %v612, 4
      %v615 = vshll.u32 %v222, 16
      %v617 = vrot.slane %v615, 5
      %v618 = vsel %vm306, %v613, %v617
      %v620 = vshrl.u32 %v223, 16
      %v622 = vrot.slane %v620, 4
      %v623 = vshll.u32 %v223, 16
      %v625 = vrot.slane %v623, 5
      %v626 = vor.u32 %v622, %v625
      %v627 = vrot.slane %v626, 4
      %v629 = vshll.u32 %v224, 16
      %v631 = vrot.slane %v629, 5
      %v632 = vsel %vm306, %v627, %v631
      %v633 = vshrl.u32 %v224, 16
      %v635 = vrot.slane %v633, 4
      %v636 = vor.u32 %v635, %v631
      %v637 = vrot.slane %v636, 4
      %v639 = vshll.u32 %v225, 16
      %v641 = vrot.slane %v639, 5
      %v642 = vsel %vm306, %v637, %v641
      %v644 = vshrl.u32 %v226, 16
      %v646 = vrot.slane %v644, 4
      %v647 = vshll.u32 %v226, 16
      %v649 = vrot.slane %v647, 5
      %v650 = vor.u32 %v646, %v649
      %v651 = vrot.slane %v650, 4
      %v653 = vshll.u32 %v227, 16
      %v655 = vrot.slane %v653, 5
      %v656 = vsel %vm306, %v651, %v655
      %v657 = vshrl.u32 %v227, 16
      %v659 = vrot.slane %v657, 4
      %v660 = vor.u32 %v659, %v655
      %v661 = vrot.slane %v660, 4
      %v663 = vshll.u32 %v228, 16
      %v665 = vrot.slane %v663, 5
      %v666 = vsel %vm306, %v661, %v665
      %v668 = vshrl.u32 %v229, 16
      %v670 = vrot.slane %v668, 4
      %v671 = vshll.u32 %v229, 16
      %v673 = vrot.slane %v671, 5
      %v674 = vor.u32 %v670, %v673
      %v675 = vrot.slane %v674, 4
      %v677 = vshll.u32 %v230, 16
      %v679 = vrot.slane %v677, 5
      %v680 = vsel %vm306, %v675, %v679
      %v681 = vshrl.u32 %v230, 16
      %v683 = vrot.slane %v681, 4
      %v684 = vor.u32 %v683, %v679
      %v685 = vrot.slane %v684, 4
      %v687 = vshll.u32 %v231, 16
      %v689 = vrot.slane %v687, 5
      %v690 = vsel %vm306, %v685, %v689
      %691 = vrot.lane.b32.xlu0 %v320, 4
      %v692 = vpop.permute.xlu0 %691
      %693 = vrot.lane.b32.xlu0 %v330, 4
      %v694 = vpop.permute.xlu0 %693
      %695 = vrot.lane.b32.xlu0 %v344, 4
      %v696 = vpop.permute.xlu0 %695
      %697 = vrot.lane.b32.xlu0 %v354, 4
      %v698 = vpop.permute.xlu0 %697
      %699 = vrot.lane.b32.xlu0 %v368, 4
      %v700 = vpop.permute.xlu0 %699
      %701 = vrot.lane.b32.xlu0 %v378, 4
      %v702 = vpop.permute.xlu0 %701
      %703 = vrot.lane.b32.xlu0 %v392, 4
      %v704 = vpop.permute.xlu0 %703
      %705 = vrot.lane.b32.xlu0 %v402, 4
      %v706 = vpop.permute.xlu0 %705
      %707 = vrot.lane.b32.xlu0 %v416, 4
      %v708 = vpop.permute.xlu0 %707
      %709 = vrot.lane.b32.xlu0 %v426, 4
      %v710 = vpop.permute.xlu0 %709
      %711 = vrot.lane.b32.xlu0 %v440, 4
      %v712 = vpop.permute.xlu0 %711
      %713 = vrot.lane.b32.xlu0 %v450, 4
      %v714 = vpop.permute.xlu0 %713
      %715 = vrot.lane.b32.xlu0 %v464, 4
      %v716 = vpop.permute.xlu0 %715
      %717 = vrot.lane.b32.xlu0 %v474, 4
      %v718 = vpop.permute.xlu0 %717
      %719 = vrot.lane.b32.xlu0 %v488, 4
      %v720 = vpop.permute.xlu0 %719
      %721 = vrot.lane.b32.xlu0 %v498, 4
      %v722 = vpop.permute.xlu0 %721
      %723 = vrot.lane.b32.xlu0 %v512, 4
      %v724 = vpop.permute.xlu0 %723
      %725 = vrot.lane.b32.xlu0 %v522, 4
      %v726 = vpop.permute.xlu0 %725
      %727 = vrot.lane.b32.xlu0 %v536, 4
      %v728 = vpop.permute.xlu0 %727
      %729 = vrot.lane.b32.xlu0 %v546, 4
      %v730 = vpop.permute.xlu0 %729
      %731 = vrot.lane.b32.xlu0 %v560, 4
      %v732 = vpop.permute.xlu0 %731
      %733 = vrot.lane.b32.xlu0 %v570, 4
      %v734 = vpop.permute.xlu0 %733
      %735 = vrot.lane.b32.xlu0 %v584, 4
      %v736 = vpop.permute.xlu0 %735
      %737 = vrot.lane.b32.xlu0 %v594, 4
      %v738 = vpop.permute.xlu0 %737
      %739 = vrot.lane.b32.xlu0 %v608, 4
      %v740 = vpop.permute.xlu0 %739
      %741 = vrot.lane.b32.xlu0 %v618, 4
      %v742 = vpop.permute.xlu0 %741
      %743 = vrot.lane.b32.xlu0 %v632, 4
      %v744 = vpop.permute.xlu0 %743
      %745 = vrot.lane.b32.xlu0 %v642, 4
      %v746 = vpop.permute.xlu0 %745
      %747 = vrot.lane.b32.xlu0 %v656, 4
      %v748 = vpop.permute.xlu0 %747
      %749 = vrot.lane.b32.xlu0 %v666, 4
      %v750 = vpop.permute.xlu0 %749
      %751 = vrot.lane.b32.xlu0 %v680, 4
      %v752 = vpop.permute.xlu0 %751
      %753 = vrot.lane.b32.xlu0 %v690, 4
      %v754 = vpop.permute.xlu0 %753
      %vm787 = vcmask 60448
      %788 = vst.msk [vmem:[#allocation2] sm:$0xf] %vm787, %v692
      %789 = vst.msk [vmem:[#allocation2 + $0x4] sm:$0xf] %vm787, %v694
      %790 = vst.msk [vmem:[#allocation2 + $0x8] sm:$0xf] %vm787, %v696
      %791 = vst.msk [vmem:[#allocation2 + $0xc] sm:$0xf] %vm787, %v698
      %792 = vst.msk [vmem:[#allocation2 + $0x10] sm:$0xf] %vm787, %v700
      %793 = vst.msk [vmem:[#allocation2 + $0x14] sm:$0xf] %vm787, %v702
      %794 = vst.msk [vmem:[#allocation2 + $0x18] sm:$0xf] %vm787, %v704
      %795 = vst.msk [vmem:[#allocation2 + $0x1c] sm:$0xf] %vm787, %v706
      %796 = vst.msk [vmem:[#allocation2 + $0x20] sm:$0xf] %vm787, %v708
      %797 = vst.msk [vmem:[#allocation2 + $0x24] sm:$0xf] %vm787, %v710
      %798 = vst.msk [vmem:[#allocation2 + $0x28] sm:$0xf] %vm787, %v712
      %799 = vst.msk [vmem:[#allocation2 + $0x2c] sm:$0xf] %vm787, %v714
      %800 = vst.msk [vmem:[#allocation2 + $0x30] sm:$0xf] %vm787, %v716
      %801 = vst.msk [vmem:[#allocation2 + $0x34] sm:$0xf] %vm787, %v718
      %802 = vst.msk [vmem:[#allocation2 + $0x38] sm:$0xf] %vm787, %v720
      %803 = vst.msk [vmem:[#allocation2 + $0x3c] sm:$0xf] %vm787, %v722
      %804 = vst.msk [vmem:[#allocation2 + $0x40] sm:$0xf] %vm787, %v724
      %805 = vst.msk [vmem:[#allocation2 + $0x44] sm:$0xf] %vm787, %v726
      %806 = vst.msk [vmem:[#allocation2 + $0x48] sm:$0xf] %vm787, %v728
      %807 = vst.msk [vmem:[#allocation2 + $0x4c] sm:$0xf] %vm787, %v730
      %808 = vst.msk [vmem:[#allocation2 + $0x50] sm:$0xf] %vm787, %v732
      %809 = vst.msk [vmem:[#allocation2 + $0x54] sm:$0xf] %vm787, %v734
      %810 = vst.msk [vmem:[#allocation2 + $0x58] sm:$0xf] %vm787, %v736
      %811 = vst.msk [vmem:[#allocation2 + $0x5c] sm:$0xf] %vm787, %v738
      %812 = vst.msk [vmem:[#allocation2 + $0x60] sm:$0xf] %vm787, %v740
      %813 = vst.msk [vmem:[#allocation2 + $0x64] sm:$0xf] %vm787, %v742
      %814 = vst.msk [vmem:[#allocation2 + $0x68] sm:$0xf] %vm787, %v744
      %815 = vst.msk [vmem:[#allocation2 + $0x6c] sm:$0xf] %vm787, %v746
      %816 = vst.msk [vmem:[#allocation2 + $0x70] sm:$0xf] %vm787, %v748
      %817 = vst.msk [vmem:[#allocation2 + $0x74] sm:$0xf] %vm787, %v750
      %818 = vst.msk [vmem:[#allocation2 + $0x78] sm:$0xf] %vm787, %v752
      %819 = vst.msk [vmem:[#allocation2 + $0x7c] sm:$0xf] %vm787, %v754
      %vm868 = vcmask 1042432
      %vm869 = vcmask 1046532
      %vm870 = vmor %vm868, %vm869
      %v871 = vrot.slane %v184, 5
      %v872 = vrot.slane %v871, 4
      %v873 = vrot.slane %v185, 5
      %v874 = vsel %vm870, %v872, %v873
      %v875 = vrot.slane %v873, 4
      %v876 = vrot.slane %v186, 5
      %v877 = vsel %vm870, %v875, %v876
      %v878 = vrot.slane %v187, 5
      %v879 = vrot.slane %v878, 4
      %v880 = vrot.slane %v188, 5
      %v881 = vsel %vm870, %v879, %v880
      %v882 = vrot.slane %v880, 4
      %v883 = vrot.slane %v189, 5
      %v884 = vsel %vm870, %v882, %v883
      %v885 = vrot.slane %v190, 5
      %v886 = vrot.slane %v885, 4
      %v887 = vrot.slane %v191, 5
      %v888 = vsel %vm870, %v886, %v887
      %v889 = vrot.slane %v887, 4
      %v890 = vrot.slane %v192, 5
      %v891 = vsel %vm870, %v889, %v890
      %v892 = vrot.slane %v193, 5
      %v893 = vrot.slane %v892, 4
      %v894 = vrot.slane %v194, 5
      %v895 = vsel %vm870, %v893, %v894
      %v896 = vrot.slane %v894, 4
      %v897 = vrot.slane %v195, 5
      %v898 = vsel %vm870, %v896, %v897
      %v899 = vrot.slane %v196, 5
      %v900 = vrot.slane %v899, 4
      %v901 = vrot.slane %v197, 5
      %v902 = vsel %vm870, %v900, %v901
      %v903 = vrot.slane %v901, 4
      %v904 = vrot.slane %v198, 5
      %v905 = vsel %vm870, %v903, %v904
      %v906 = vrot.slane %v199, 5
      %v907 = vrot.slane %v906, 4
      %v908 = vrot.slane %v200, 5
      %v909 = vsel %vm870, %v907, %v908
      %v910 = vrot.slane %v908, 4
      %v911 = vrot.slane %v201, 5
      %v912 = vsel %vm870, %v910, %v911
      %v913 = vrot.slane %v202, 5
      %v914 = vrot.slane %v913, 4
      %v915 = vrot.slane %v203, 5
      %v916 = vsel %vm870, %v914, %v915
      %v917 = vrot.slane %v915, 4
      %v918 = vrot.slane %v204, 5
      %v919 = vsel %vm870, %v917, %v918
      %v920 = vrot.slane %v205, 5
      %v921 = vrot.slane %v920, 4
      %v922 = vrot.slane %v206, 5
      %v923 = vsel %vm870, %v921, %v922
      %v924 = vrot.slane %v922, 4
      %v925 = vrot.slane %v207, 5
      %v926 = vsel %vm870, %v924, %v925
      %v927 = vrot.slane %v208, 5
      %v928 = vrot.slane %v927, 4
      %v929 = vrot.slane %v209, 5
      %v930 = vsel %vm870, %v928, %v929
      %v931 = vrot.slane %v929, 4
      %v932 = vrot.slane %v210, 5
      %v933 = vsel %vm870, %v931, %v932
      %v934 = vrot.slane %v211, 5
      %v935 = vrot.slane %v934, 4
      %v936 = vrot.slane %v212, 5
      %v937 = vsel %vm870, %v935, %v936
      %v938 = vrot.slane %v936, 4
      %v939 = vrot.slane %v213, 5
      %v940 = vsel %vm870, %v938, %v939
      %v941 = vrot.slane %v214, 5
      %v942 = vrot.slane %v941, 4
      %v943 = vrot.slane %v215, 5
      %v944 = vsel %vm870, %v942, %v943
      %v945 = vrot.slane %v943, 4
      %v946 = vrot.slane %v216, 5
      %v947 = vsel %vm870, %v945, %v946
      %v948 = vrot.slane %v217, 5
      %v949 = vrot.slane %v948, 4
      %v950 = vrot.slane %v218, 5
      %v951 = vsel %vm870, %v949, %v950
      %v952 = vrot.slane %v950, 4
      %v953 = vrot.slane %v219, 5
      %v954 = vsel %vm870, %v952, %v953
      %v955 = vrot.slane %v220, 5
      %v956 = vrot.slane %v955, 4
      %v957 = vrot.slane %v221, 5
      %v958 = vsel %vm870, %v956, %v957
      %v959 = vrot.slane %v957, 4
      %v960 = vrot.slane %v222, 5
      %v961 = vsel %vm870, %v959, %v960
      %v962 = vrot.slane %v223, 5
      %v963 = vrot.slane %v962, 4
      %v964 = vrot.slane %v224, 5
      %v965 = vsel %vm870, %v963, %v964
      %v966 = vrot.slane %v964, 4
      %v967 = vrot.slane %v225, 5
      %v968 = vsel %vm870, %v966, %v967
      %v969 = vrot.slane %v226, 5
      %v970 = vrot.slane %v969, 4
      %v971 = vrot.slane %v227, 5
      %v972 = vsel %vm870, %v970, %v971
      %v973 = vrot.slane %v971, 4
      %v974 = vrot.slane %v228, 5
      %v975 = vsel %vm870, %v973, %v974
      %v976 = vrot.slane %v229, 5
      %v977 = vrot.slane %v976, 4
      %v978 = vrot.slane %v230, 5
      %v979 = vsel %vm870, %v977, %v978
      %v980 = vrot.slane %v978, 4
      %v981 = vrot.slane %v231, 5
      %v982 = vsel %vm870, %v980, %v981
      %983 = vrot.lane.b32.xlu0 %v874, 8
      %v984 = vpop.permute.xlu0 %983
      %985 = vrot.lane.b32.xlu0 %v877, 8
      %v986 = vpop.permute.xlu0 %985
      %987 = vrot.lane.b32.xlu0 %v881, 8
      %v988 = vpop.permute.xlu0 %987
      %989 = vrot.lane.b32.xlu0 %v884, 8
      %v990 = vpop.permute.xlu0 %989
      %991 = vrot.lane.b32.xlu0 %v888, 8
      %v992 = vpop.permute.xlu0 %991
      %993 = vrot.lane.b32.xlu0 %v891, 8
      %v994 = vpop.permute.xlu0 %993
      %995 = vrot.lane.b32.xlu0 %v895, 8
      %v996 = vpop.permute.xlu0 %995
      %997 = vrot.lane.b32.xlu0 %v898, 8
      %v998 = vpop.permute.xlu0 %997
      %999 = vrot.lane.b32.xlu0 %v902, 8
      %v1000 = vpop.permute.xlu0 %999
      %1001 = vrot.lane.b32.xlu0 %v905, 8
      %v1002 = vpop.permute.xlu0 %1001
      %1003 = vrot.lane.b32.xlu0 %v909, 8
      %v1004 = vpop.permute.xlu0 %1003
      %1005 = vrot.lane.b32.xlu0 %v912, 8
      %v1006 = vpop.permute.xlu0 %1005
      %1007 = vrot.lane.b32.xlu0 %v916, 8
      %v1008 = vpop.permute.xlu0 %1007
      %1009 = vrot.lane.b32.xlu0 %v919, 8
      %v1010 = vpop.permute.xlu0 %1009
      %1011 = vrot.lane.b32.xlu0 %v923, 8
      %v1012 = vpop.permute.xlu0 %1011
      %1013 = vrot.lane.b32.xlu0 %v926, 8
      %v1014 = vpop.permute.xlu0 %1013
      %1015 = vrot.lane.b32.xlu0 %v930, 8
      %v1016 = vpop.permute.xlu0 %1015
      %1017 = vrot.lane.b32.xlu0 %v933, 8
      %v1018 = vpop.permute.xlu0 %1017
      %1019 = vrot.lane.b32.xlu0 %v937, 8
      %v1020 = vpop.permute.xlu0 %1019
      %1021 = vrot.lane.b32.xlu0 %v940, 8
      %v1022 = vpop.permute.xlu0 %1021
      %1023 = vrot.lane.b32.xlu0 %v944, 8
      %v1024 = vpop.permute.xlu0 %1023
      %1025 = vrot.lane.b32.xlu0 %v947, 8
      %v1026 = vpop.permute.xlu0 %1025
      %1027 = vrot.lane.b32.xlu0 %v951, 8
      %v1028 = vpop.permute.xlu0 %1027
      %1029 = vrot.lane.b32.xlu0 %v954, 8
      %v1030 = vpop.permute.xlu0 %1029
      %1031 = vrot.lane.b32.xlu0 %v958, 8
      %v1032 = vpop.permute.xlu0 %1031
      %1033 = vrot.lane.b32.xlu0 %v961, 8
      %v1034 = vpop.permute.xlu0 %1033
      %1035 = vrot.lane.b32.xlu0 %v965, 8
      %v1036 = vpop.permute.xlu0 %1035
      %1037 = vrot.lane.b32.xlu0 %v968, 8
      %v1038 = vpop.permute.xlu0 %1037
      %1039 = vrot.lane.b32.xlu0 %v972, 8
      %v1040 = vpop.permute.xlu0 %1039
      %1041 = vrot.lane.b32.xlu0 %v975, 8
      %v1042 = vpop.permute.xlu0 %1041
      %1043 = vrot.lane.b32.xlu0 %v979, 8
      %v1044 = vpop.permute.xlu0 %1043
      %1045 = vrot.lane.b32.xlu0 %v982, 8
      %v1046 = vpop.permute.xlu0 %1045
      %vm1079 = vcmask 93248
      %1080 = vst.msk [vmem:[#allocation2] sm:$0xf] %vm1079, %v984
      %1081 = vst.msk [vmem:[#allocation2 + $0x4] sm:$0xf] %vm1079, %v986
      %1082 = vst.msk [vmem:[#allocation2 + $0x8] sm:$0xf] %vm1079, %v988
      %1083 = vst.msk [vmem:[#allocation2 + $0xc] sm:$0xf] %vm1079, %v990
      %1084 = vst.msk [vmem:[#allocation2 + $0x10] sm:$0xf] %vm1079, %v992
      %1085 = vst.msk [vmem:[#allocation2 + $0x14] sm:$0xf] %vm1079, %v994
      %1086 = vst.msk [vmem:[#allocation2 + $0x18] sm:$0xf] %vm1079, %v996
      %1087 = vst.msk [vmem:[#allocation2 + $0x1c] sm:$0xf] %vm1079, %v998
      %1088 = vst.msk [vmem:[#allocation2 + $0x20] sm:$0xf] %vm1079, %v1000
      %1089 = vst.msk [vmem:[#allocation2 + $0x24] sm:$0xf] %vm1079, %v1002
      %1090 = vst.msk [vmem:[#allocation2 + $0x28] sm:$0xf] %vm1079, %v1004
      %1091 = vst.msk [vmem:[#allocation2 + $0x2c] sm:$0xf] %vm1079, %v1006
      %1092 = vst.msk [vmem:[#allocation2 + $0x30] sm:$0xf] %vm1079, %v1008
      %1093 = vst.msk [vmem:[#allocation2 + $0x34] sm:$0xf] %vm1079, %v1010
      %1094 = vst.msk [vmem:[#allocation2 + $0x38] sm:$0xf] %vm1079, %v1012
      %1095 = vst.msk [vmem:[#allocation2 + $0x3c] sm:$0xf] %vm1079, %v1014
      %1096 = vst.msk [vmem:[#allocation2 + $0x40] sm:$0xf] %vm1079, %v1016
      %1097 = vst.msk [vmem:[#allocation2 + $0x44] sm:$0xf] %vm1079, %v1018
      %1098 = vst.msk [vmem:[#allocation2 + $0x48] sm:$0xf] %vm1079, %v1020
      %1099 = vst.msk [vmem:[#allocation2 + $0x4c] sm:$0xf] %vm1079, %v1022
      %1100 = vst.msk [vmem:[#allocation2 + $0x50] sm:$0xf] %vm1079, %v1024
      %1101 = vst.msk [vmem:[#allocation2 + $0x54] sm:$0xf] %vm1079, %v1026
      %1102 = vst.msk [vmem:[#allocation2 + $0x58] sm:$0xf] %vm1079, %v1028
      %1103 = vst.msk [vmem:[#allocation2 + $0x5c] sm:$0xf] %vm1079, %v1030
      %1104 = vst.msk [vmem:[#allocation2 + $0x60] sm:$0xf] %vm1079, %v1032
      %1105 = vst.msk [vmem:[#allocation2 + $0x64] sm:$0xf] %vm1079, %v1034
      %1106 = vst.msk [vmem:[#allocation2 + $0x68] sm:$0xf] %vm1079, %v1036
      %1107 = vst.msk [vmem:[#allocation2 + $0x6c] sm:$0xf] %vm1079, %v1038
      %1108 = vst.msk [vmem:[#allocation2 + $0x70] sm:$0xf] %vm1079, %v1040
      %1109 = vst.msk [vmem:[#allocation2 + $0x74] sm:$0xf] %vm1079, %v1042
      %1110 = vst.msk [vmem:[#allocation2 + $0x78] sm:$0xf] %vm1079, %v1044
      %1111 = vst.msk [vmem:[#allocation2 + $0x7c] sm:$0xf] %vm1079, %v1046
      %1114 = vrot.lane.b32.xlu0 %v187, 12
      %v1115 = vpop.permute.xlu0 %1114
      %1116 = vrot.lane.b32.xlu0 %v188, 12
      %v1117 = vpop.permute.xlu0 %1116
      %1118 = vrot.lane.b32.xlu0 %v190, 12
      %v1119 = vpop.permute.xlu0 %1118
      %1120 = vrot.lane.b32.xlu0 %v191, 12
      %v1121 = vpop.permute.xlu0 %1120
      %1122 = vrot.lane.b32.xlu0 %v193, 12
      %v1123 = vpop.permute.xlu0 %1122
      %1124 = vrot.lane.b32.xlu0 %v194, 12
      %v1125 = vpop.permute.xlu0 %1124
      %1126 = vrot.lane.b32.xlu0 %v196, 12
      %v1127 = vpop.permute.xlu0 %1126
      %1128 = vrot.lane.b32.xlu0 %v197, 12
      %v1129 = vpop.permute.xlu0 %1128
      %1130 = vrot.lane.b32.xlu0 %v199, 12
      %v1131 = vpop.permute.xlu0 %1130
      %1132 = vrot.lane.b32.xlu0 %v200, 12
      %v1133 = vpop.permute.xlu0 %1132
      %1134 = vrot.lane.b32.xlu0 %v202, 12
      %v1135 = vpop.permute.xlu0 %1134
      %1136 = vrot.lane.b32.xlu0 %v203, 12
      %v1137 = vpop.permute.xlu0 %1136
      %1138 = vrot.lane.b32.xlu0 %v205, 12
      %v1139 = vpop.permute.xlu0 %1138
      %1140 = vrot.lane.b32.xlu0 %v206, 12
      %v1141 = vpop.permute.xlu0 %1140
      %1142 = vrot.lane.b32.xlu0 %v208, 12
      %v1143 = vpop.permute.xlu0 %1142
      %1144 = vrot.lane.b32.xlu0 %v209, 12
      %v1145 = vpop.permute.xlu0 %1144
      %1146 = vrot.lane.b32.xlu0 %v211, 12
      %v1147 = vpop.permute.xlu0 %1146
      %1148 = vrot.lane.b32.xlu0 %v212, 12
      %v1149 = vpop.permute.xlu0 %1148
      %1150 = vrot.lane.b32.xlu0 %v214, 12
      %v1151 = vpop.permute.xlu0 %1150
      %1152 = vrot.lane.b32.xlu0 %v215, 12
      %v1153 = vpop.permute.xlu0 %1152
      %1154 = vrot.lane.b32.xlu0 %v217, 12
      %v1155 = vpop.permute.xlu0 %1154
      %1156 = vrot.lane.b32.xlu0 %v218, 12
      %v1157 = vpop.permute.xlu0 %1156
      %1158 = vrot.lane.b32.xlu0 %v220, 12
      %v1159 = vpop.permute.xlu0 %1158
      %1160 = vrot.lane.b32.xlu0 %v221, 12
      %v1161 = vpop.permute.xlu0 %1160
      %1162 = vrot.lane.b32.xlu0 %v223, 12
      %v1163 = vpop.permute.xlu0 %1162
      %1164 = vrot.lane.b32.xlu0 %v224, 12
      %v1165 = vpop.permute.xlu0 %1164
      %1166 = vrot.lane.b32.xlu0 %v226, 12
      %v1167 = vpop.permute.xlu0 %1166
      %1168 = vrot.lane.b32.xlu0 %v227, 12
      %v1169 = vpop.permute.xlu0 %1168
      %1170 = vrot.lane.b32.xlu0 %v229, 12
      %v1171 = vpop.permute.xlu0 %1170
      %1172 = vrot.lane.b32.xlu0 %v230, 12
      %v1173 = vpop.permute.xlu0 %1172
      %1174 = vrot.lane.b32.xlu0 %v232, 12
      %v1175 = vpop.permute.xlu0 %1174
      %1176 = vrot.lane.b32.xlu0 %v233, 12
      %v1177 = vpop.permute.xlu0 %1176
      %vm1210 = vcmask 126048
      %1211 = vst.msk [vmem:[#allocation2] sm:$0xf] %vm1210, %v1115
      %1212 = vst.msk [vmem:[#allocation2 + $0x4] sm:$0xf] %vm1210, %v1117
      %1213 = vst.msk [vmem:[#allocation2 + $0x8] sm:$0xf] %vm1210, %v1119
      %1214 = vst.msk [vmem:[#allocation2 + $0xc] sm:$0xf] %vm1210, %v1121
      %1215 = vst.msk [vmem:[#allocation2 + $0x10] sm:$0xf] %vm1210, %v1123
      %1216 = vst.msk [vmem:[#allocation2 + $0x14] sm:$0xf] %vm1210, %v1125
      %1217 = vst.msk [vmem:[#allocation2 + $0x18] sm:$0xf] %vm1210, %v1127
      %1218 = vst.msk [vmem:[#allocation2 + $0x1c] sm:$0xf] %vm1210, %v1129
      %1219 = vst.msk [vmem:[#allocation2 + $0x20] sm:$0xf] %vm1210, %v1131
      %1220 = vst.msk [vmem:[#allocation2 + $0x24] sm:$0xf] %vm1210, %v1133
      %1221 = vst.msk [vmem:[#allocation2 + $0x28] sm:$0xf] %vm1210, %v1135
      %1222 = vst.msk [vmem:[#allocation2 + $0x2c] sm:$0xf] %vm1210, %v1137
      %1223 = vst.msk [vmem:[#allocation2 + $0x30] sm:$0xf] %vm1210, %v1139
      %1224 = vst.msk [vmem:[#allocation2 + $0x34] sm:$0xf] %vm1210, %v1141
      %1225 = vst.msk [vmem:[#allocation2 + $0x38] sm:$0xf] %vm1210, %v1143
      %1226 = vst.msk [vmem:[#allocation2 + $0x3c] sm:$0xf] %vm1210, %v1145
      %1227 = vst.msk [vmem:[#allocation2 + $0x40] sm:$0xf] %vm1210, %v1147
      %1228 = vst.msk [vmem:[#allocation2 + $0x44] sm:$0xf] %vm1210, %v1149
      %1229 = vst.msk [vmem:[#allocation2 + $0x48] sm:$0xf] %vm1210, %v1151
      %1230 = vst.msk [vmem:[#allocation2 + $0x4c] sm:$0xf] %vm1210, %v1153
      %1231 = vst.msk [vmem:[#allocation2 + $0x50] sm:$0xf] %vm1210, %v1155
      %1232 = vst.msk [vmem:[#allocation2 + $0x54] sm:$0xf] %vm1210, %v1157
      %1233 = vst.msk [vmem:[#allocation2 + $0x58] sm:$0xf] %vm1210, %v1159
      %1234 = vst.msk [vmem:[#allocation2 + $0x5c] sm:$0xf] %vm1210, %v1161
      %1235 = vst.msk [vmem:[#allocation2 + $0x60] sm:$0xf] %vm1210, %v1163
      %1236 = vst.msk [vmem:[#allocation2 + $0x64] sm:$0xf] %vm1210, %v1165
      %1237 = vst.msk [vmem:[#allocation2 + $0x68] sm:$0xf] %vm1210, %v1167
      %1238 = vst.msk [vmem:[#allocation2 + $0x6c] sm:$0xf] %vm1210, %v1169
      %1239 = vst.msk [vmem:[#allocation2 + $0x70] sm:$0xf] %vm1210, %v1171
      %1240 = vst.msk [vmem:[#allocation2 + $0x74] sm:$0xf] %vm1210, %v1173
      %1241 = vst.msk [vmem:[#allocation2 + $0x78] sm:$0xf] %vm1210, %v1175
      %1242 = vst.msk [vmem:[#allocation2 + $0x7c] sm:$0xf] %vm1210, %v1177
      %v1244 = vshrl.u32 %v232, 16
      %v1246 = vrot.slane %v1244, 4
      %v1247 = vshll.u32 %v232, 16
      %v1249 = vrot.slane %v1247, 5
      %v1250 = vor.u32 %v1246, %v1249
      %v1251 = vrot.slane %v1250, 4
      %v1253 = vshll.u32 %v233, 16
      %v1255 = vrot.slane %v1253, 5
      %v1256 = vsel %vm306, %v1251, %v1255
      %v1257 = vshrl.u32 %v233, 16
      %v1259 = vrot.slane %v1257, 4
      %v1260 = vor.u32 %v1259, %v1255
      %v1261 = vrot.slane %v1260, 4
      %v1263 = vshll.u32 %v234, 16
      %v1265 = vrot.slane %v1263, 5
      %v1266 = vsel %vm306, %v1261, %v1265
      %1267 = vrot.lane.b32.xlu0 %v344, 16
      %v1268 = vpop.permute.xlu0 %1267
      %1269 = vrot.lane.b32.xlu0 %v354, 16
      %v1270 = vpop.permute.xlu0 %1269
      %1271 = vrot.lane.b32.xlu0 %v368, 16
      %v1272 = vpop.permute.xlu0 %1271
      %1273 = vrot.lane.b32.xlu0 %v378, 16
      %v1274 = vpop.permute.xlu0 %1273
      %1275 = vrot.lane.b32.xlu0 %v392, 16
      %v1276 = vpop.permute.xlu0 %1275
      %1277 = vrot.lane.b32.xlu0 %v402, 16
      %v1278 = vpop.permute.xlu0 %1277
      %1279 = vrot.lane.b32.xlu0 %v416, 16
      %v1280 = vpop.permute.xlu0 %1279
      %1281 = vrot.lane.b32.xlu0 %v426, 16
      %v1282 = vpop.permute.xlu0 %1281
      %1283 = vrot.lane.b32.xlu0 %v440, 16
      %v1284 = vpop.permute.xlu0 %1283
      %1285 = vrot.lane.b32.xlu0 %v450, 16
      %v1286 = vpop.permute.xlu0 %1285
      %1287 = vrot.lane.b32.xlu0 %v464, 16
      %v1288 = vpop.permute.xlu0 %1287
      %1289 = vrot.lane.b32.xlu0 %v474, 16
      %v1290 = vpop.permute.xlu0 %1289
      %1291 = vrot.lane.b32.xlu0 %v488, 16
      %v1292 = vpop.permute.xlu0 %1291
      %1293 = vrot.lane.b32.xlu0 %v498, 16
      %v1294 = vpop.permute.xlu0 %1293
      %1295 = vrot.lane.b32.xlu0 %v512, 16
      %v1296 = vpop.permute.xlu0 %1295
      %1297 = vrot.lane.b32.xlu0 %v522, 16
      %v1298 = vpop.permute.xlu0 %1297
      %1299 = vrot.lane.b32.xlu0 %v536, 16
      %v1300 = vpop.permute.xlu0 %1299
      %1301 = vrot.lane.b32.xlu0 %v546, 16
      %v1302 = vpop.permute.xlu0 %1301
      %1303 = vrot.lane.b32.xlu0 %v560, 16
      %v1304 = vpop.permute.xlu0 %1303
      %1305 = vrot.lane.b32.xlu0 %v570, 16
      %v1306 = vpop.permute.xlu0 %1305
      %1307 = vrot.lane.b32.xlu0 %v584, 16
      %v1308 = vpop.permute.xlu0 %1307
      %1309 = vrot.lane.b32.xlu0 %v594, 16
      %v1310 = vpop.permute.xlu0 %1309
      %1311 = vrot.lane.b32.xlu0 %v608, 16
      %v1312 = vpop.permute.xlu0 %1311
      %1313 = vrot.lane.b32.xlu0 %v618, 16
      %v1314 = vpop.permute.xlu0 %1313
      %1315 = vrot.lane.b32.xlu0 %v632, 16
      %v1316 = vpop.permute.xlu0 %1315
      %1317 = vrot.lane.b32.xlu0 %v642, 16
      %v1318 = vpop.permute.xlu0 %1317
      %1319 = vrot.lane.b32.xlu0 %v656, 16
      %v1320 = vpop.permute.xlu0 %1319
      %1321 = vrot.lane.b32.xlu0 %v666, 16
      %v1322 = vpop.permute.xlu0 %1321
      %1323 = vrot.lane.b32.xlu0 %v680, 16
      %v1324 = vpop.permute.xlu0 %1323
      %1325 = vrot.lane.b32.xlu0 %v690, 16
      %v1326 = vpop.permute.xlu0 %1325
      %1327 = vrot.lane.b32.xlu0 %v1256, 16
      %v1328 = vpop.permute.xlu0 %1327
      %1329 = vrot.lane.b32.xlu0 %v1266, 16
      %v1330 = vpop.permute.xlu0 %1329
      %vm1363 = vcmask 158848
      %1364 = vst.msk [vmem:[#allocation2] sm:$0xf] %vm1363, %v1268
      %1365 = vst.msk [vmem:[#allocation2 + $0x4] sm:$0xf] %vm1363, %v1270
      %1366 = vst.msk [vmem:[#allocation2 + $0x8] sm:$0xf] %vm1363, %v1272
      %1367 = vst.msk [vmem:[#allocation2 + $0xc] sm:$0xf] %vm1363, %v1274
      %1368 = vst.msk [vmem:[#allocation2 + $0x10] sm:$0xf] %vm1363, %v1276
      %1369 = vst.msk [vmem:[#allocation2 + $0x14] sm:$0xf] %vm1363, %v1278
      %1370 = vst.msk [vmem:[#allocation2 + $0x18] sm:$0xf] %vm1363, %v1280
      %1371 = vst.msk [vmem:[#allocation2 + $0x1c] sm:$0xf] %vm1363, %v1282
      %1372 = vst.msk [vmem:[#allocation2 + $0x20] sm:$0xf] %vm1363, %v1284
      %1373 = vst.msk [vmem:[#allocation2 + $0x24] sm:$0xf] %vm1363, %v1286
      %1374 = vst.msk [vmem:[#allocation2 + $0x28] sm:$0xf] %vm1363, %v1288
      %1375 = vst.msk [vmem:[#allocation2 + $0x2c] sm:$0xf] %vm1363, %v1290
      %1376 = vst.msk [vmem:[#allocation2 + $0x30] sm:$0xf] %vm1363, %v1292
      %1377 = vst.msk [vmem:[#allocation2 + $0x34] sm:$0xf] %vm1363, %v1294
      %1378 = vst.msk [vmem:[#allocation2 + $0x38] sm:$0xf] %vm1363, %v1296
      %1379 = vst.msk [vmem:[#allocation2 + $0x3c] sm:$0xf] %vm1363, %v1298
      %1380 = vst.msk [vmem:[#allocation2 + $0x40] sm:$0xf] %vm1363, %v1300
      %1381 = vst.msk [vmem:[#allocation2 + $0x44] sm:$0xf] %vm1363, %v1302
      %1382 = vst.msk [vmem:[#allocation2 + $0x48] sm:$0xf] %vm1363, %v1304
      %1383 = vst.msk [vmem:[#allocation2 + $0x4c] sm:$0xf] %vm1363, %v1306
      %1384 = vst.msk [vmem:[#allocation2 + $0x50] sm:$0xf] %vm1363, %v1308
      %1385 = vst.msk [vmem:[#allocation2 + $0x54] sm:$0xf] %vm1363, %v1310
      %1386 = vst.msk [vmem:[#allocation2 + $0x58] sm:$0xf] %vm1363, %v1312
      %1387 = vst.msk [vmem:[#allocation2 + $0x5c] sm:$0xf] %vm1363, %v1314
      %1388 = vst.msk [vmem:[#allocation2 + $0x60] sm:$0xf] %vm1363, %v1316
      %1389 = vst.msk [vmem:[#allocation2 + $0x64] sm:$0xf] %vm1363, %v1318
      %1390 = vst.msk [vmem:[#allocation2 + $0x68] sm:$0xf] %vm1363, %v1320
      %1391 = vst.msk [vmem:[#allocation2 + $0x6c] sm:$0xf] %vm1363, %v1322
      %1392 = vst.msk [vmem:[#allocation2 + $0x70] sm:$0xf] %vm1363, %v1324
      %1393 = vst.msk [vmem:[#allocation2 + $0x74] sm:$0xf] %vm1363, %v1326
      %1394 = vst.msk [vmem:[#allocation2 + $0x78] sm:$0xf] %vm1363, %v1328
      %1395 = vst.msk [vmem:[#allocation2 + $0x7c] sm:$0xf] %vm1363, %v1330
      %v1397 = vrot.slane %v232, 5
      %v1398 = vrot.slane %v1397, 4
      %v1399 = vrot.slane %v233, 5
      %v1400 = vsel %vm870, %v1398, %v1399
      %v1401 = vrot.slane %v1399, 4
      %v1402 = vrot.slane %v234, 5
      %v1403 = vsel %vm870, %v1401, %v1402
      %1404 = vrot.lane.b32.xlu0 %v881, 20
      %v1405 = vpop.permute.xlu0 %1404
      %1406 = vrot.lane.b32.xlu0 %v884, 20
      %v1407 = vpop.permute.xlu0 %1406
      %1408 = vrot.lane.b32.xlu0 %v888, 20
      %v1409 = vpop.permute.xlu0 %1408
      %1410 = vrot.lane.b32.xlu0 %v891, 20
      %v1411 = vpop.permute.xlu0 %1410
      %1412 = vrot.lane.b32.xlu0 %v895, 20
      %v1413 = vpop.permute.xlu0 %1412
      %1414 = vrot.lane.b32.xlu0 %v898, 20
      %v1415 = vpop.permute.xlu0 %1414
      %1416 = vrot.lane.b32.xlu0 %v902, 20
      %v1417 = vpop.permute.xlu0 %1416
      %1418 = vrot.lane.b32.xlu0 %v905, 20
      %v1419 = vpop.permute.xlu0 %1418
      %1420 = vrot.lane.b32.xlu0 %v909, 20
      %v1421 = vpop.permute.xlu0 %1420
      %1422 = vrot.lane.b32.xlu0 %v912, 20
      %v1423 = vpop.permute.xlu0 %1422
      %1424 = vrot.lane.b32.xlu0 %v916, 20
      %v1425 = vpop.permute.xlu0 %1424
      %1426 = vrot.lane.b32.xlu0 %v919, 20
      %v1427 = vpop.permute.xlu0 %1426
      %1428 = vrot.lane.b32.xlu0 %v923, 20
      %v1429 = vpop.permute.xlu0 %1428
      %1430 = vrot.lane.b32.xlu0 %v926, 20
      %v1431 = vpop.permute.xlu0 %1430
      %1432 = vrot.lane.b32.xlu0 %v930, 20
      %v1433 = vpop.permute.xlu0 %1432
      %1434 = vrot.lane.b32.xlu0 %v933, 20
      %v1435 = vpop.permute.xlu0 %1434
      %1436 = vrot.lane.b32.xlu0 %v937, 20
      %v1437 = vpop.permute.xlu0 %1436
      %1438 = vrot.lane.b32.xlu0 %v940, 20
      %v1439 = vpop.permute.xlu0 %1438
      %1440 = vrot.lane.b32.xlu0 %v944, 20
      %v1441 = vpop.permute.xlu0 %1440
      %1442 = vrot.lane.b32.xlu0 %v947, 20
      %v1443 = vpop.permute.xlu0 %1442
      %1444 = vrot.lane.b32.xlu0 %v951, 20
      %v1445 = vpop.permute.xlu0 %1444
      %1446 = vrot.lane.b32.xlu0 %v954, 20
      %v1447 = vpop.permute.xlu0 %1446
      %1448 = vrot.lane.b32.xlu0 %v958, 20
      %v1449 = vpop.permute.xlu0 %1448
      %1450 = vrot.lane.b32.xlu0 %v961, 20
      %v1451 = vpop.permute.xlu0 %1450
      %1452 = vrot.lane.b32.xlu0 %v965, 20
      %v1453 = vpop.permute.xlu0 %1452
      %1454 = vrot.lane.b32.xlu0 %v968, 20
      %v1455 = vpop.permute.xlu0 %1454
      %1456 = vrot.lane.b32.xlu0 %v972, 20
      %v1457 = vpop.permute.xlu0 %1456
      %1458 = vrot.lane.b32.xlu0 %v975, 20
      %v1459 = vpop.permute.xlu0 %1458
      %1460 = vrot.lane.b32.xlu0 %v979, 20
      %v1461 = vpop.permute.xlu0 %1460
      %1462 = vrot.lane.b32.xlu0 %v982, 20
      %v1463 = vpop.permute.xlu0 %1462
      %1464 = vrot.lane.b32.xlu0 %v1400, 20
      %v1465 = vpop.permute.xlu0 %1464
      %1466 = vrot.lane.b32.xlu0 %v1403, 20
      %v1467 = vpop.permute.xlu0 %1466
      %vm1500 = vcmask 191648
      %1501 = vst.msk [vmem:[#allocation2] sm:$0xf] %vm1500, %v1405
      %1502 = vst.msk [vmem:[#allocation2 + $0x4] sm:$0xf] %vm1500, %v1407
      %1503 = vst.msk [vmem:[#allocation2 + $0x8] sm:$0xf] %vm1500, %v1409
      %1504 = vst.msk [vmem:[#allocation2 + $0xc] sm:$0xf] %vm1500, %v1411
      %1505 = vst.msk [vmem:[#allocation2 + $0x10] sm:$0xf] %vm1500, %v1413
      %1506 = vst.msk [vmem:[#allocation2 + $0x14] sm:$0xf] %vm1500, %v1415
      %1507 = vst.msk [vmem:[#allocation2 + $0x18] sm:$0xf] %vm1500, %v1417
      %1508 = vst.msk [vmem:[#allocation2 + $0x1c] sm:$0xf] %vm1500, %v1419
      %1509 = vst.msk [vmem:[#allocation2 + $0x20] sm:$0xf] %vm1500, %v1421
      %1510 = vst.msk [vmem:[#allocation2 + $0x24] sm:$0xf] %vm1500, %v1423
      %1511 = vst.msk [vmem:[#allocation2 + $0x28] sm:$0xf] %vm1500, %v1425
      %1512 = vst.msk [vmem:[#allocation2 + $0x2c] sm:$0xf] %vm1500, %v1427
      %1513 = vst.msk [vmem:[#allocation2 + $0x30] sm:$0xf] %vm1500, %v1429
      %1514 = vst.msk [vmem:[#allocation2 + $0x34] sm:$0xf] %vm1500, %v1431
      %1515 = vst.msk [vmem:[#allocation2 + $0x38] sm:$0xf] %vm1500, %v1433
      %1516 = vst.msk [vmem:[#allocation2 + $0x3c] sm:$0xf] %vm1500, %v1435
      %1517 = vst.msk [vmem:[#allocation2 + $0x40] sm:$0xf] %vm1500, %v1437
      %1518 = vst.msk [vmem:[#allocation2 + $0x44] sm:$0xf] %vm1500, %v1439
      %1519 = vst.msk [vmem:[#allocation2 + $0x48] sm:$0xf] %vm1500, %v1441
      %1520 = vst.msk [vmem:[#allocation2 + $0x4c] sm:$0xf] %vm1500, %v1443
      %1521 = vst.msk [vmem:[#allocation2 + $0x50] sm:$0xf] %vm1500, %v1445
      %1522 = vst.msk [vmem:[#allocation2 + $0x54] sm:$0xf] %vm1500, %v1447
      %1523 = vst.msk [vmem:[#allocation2 + $0x58] sm:$0xf] %vm1500, %v1449
      %1524 = vst.msk [vmem:[#allocation2 + $0x5c] sm:$0xf] %vm1500, %v1451
      %1525 = vst.msk [vmem:[#allocation2 + $0x60] sm:$0xf] %vm1500, %v1453
      %1526 = vst.msk [vmem:[#allocation2 + $0x64] sm:$0xf] %vm1500, %v1455
      %1527 = vst.msk [vmem:[#allocation2 + $0x68] sm:$0xf] %vm1500, %v1457
      %1528 = vst.msk [vmem:[#allocation2 + $0x6c] sm:$0xf] %vm1500, %v1459
      %1529 = vst.msk [vmem:[#allocation2 + $0x70] sm:$0xf] %vm1500, %v1461
      %1530 = vst.msk [vmem:[#allocation2 + $0x74] sm:$0xf] %vm1500, %v1463
      %1531 = vst.msk [vmem:[#allocation2 + $0x78] sm:$0xf] %vm1500, %v1465
      %1532 = vst.msk [vmem:[#allocation2 + $0x7c] sm:$0xf] %vm1500, %v1467
      %1535 = vrot.lane.b32.xlu0 %v190, 24
      %v1536 = vpop.permute.xlu0 %1535
      %1537 = vrot.lane.b32.xlu0 %v191, 24
      %v1538 = vpop.permute.xlu0 %1537
      %1539 = vrot.lane.b32.xlu0 %v193, 24
      %v1540 = vpop.permute.xlu0 %1539
      %1541 = vrot.lane.b32.xlu0 %v194, 24
      %v1542 = vpop.permute.xlu0 %1541
      %1543 = vrot.lane.b32.xlu0 %v196, 24
      %v1544 = vpop.permute.xlu0 %1543
      %1545 = vrot.lane.b32.xlu0 %v197, 24
      %v1546 = vpop.permute.xlu0 %1545
      %1547 = vrot.lane.b32.xlu0 %v199, 24
      %v1548 = vpop.permute.xlu0 %1547
      %1549 = vrot.lane.b32.xlu0 %v200, 24
      %v1550 = vpop.permute.xlu0 %1549
      %1551 = vrot.lane.b32.xlu0 %v202, 24
      %v1552 = vpop.permute.xlu0 %1551
      %1553 = vrot.lane.b32.xlu0 %v203, 24
      %v1554 = vpop.permute.xlu0 %1553
      %1555 = vrot.lane.b32.xlu0 %v205, 24
      %v1556 = vpop.permute.xlu0 %1555
      %1557 = vrot.lane.b32.xlu0 %v206, 24
      %v1558 = vpop.permute.xlu0 %1557
      %1559 = vrot.lane.b32.xlu0 %v208, 24
      %v1560 = vpop.permute.xlu0 %1559
      %1561 = vrot.lane.b32.xlu0 %v209, 24
      %v1562 = vpop.permute.xlu0 %1561
      %1563 = vrot.lane.b32.xlu0 %v211, 24
      %v1564 = vpop.permute.xlu0 %1563
      %1565 = vrot.lane.b32.xlu0 %v212, 24
      %v1566 = vpop.permute.xlu0 %1565
      %1567 = vrot.lane.b32.xlu0 %v214, 24
      %v1568 = vpop.permute.xlu0 %1567
      %1569 = vrot.lane.b32.xlu0 %v215, 24
      %v1570 = vpop.permute.xlu0 %1569
      %1571 = vrot.lane.b32.xlu0 %v217, 24
      %v1572 = vpop.permute.xlu0 %1571
      %1573 = vrot.lane.b32.xlu0 %v218, 24
      %v1574 = vpop.permute.xlu0 %1573
      %1575 = vrot.lane.b32.xlu0 %v220, 24
      %v1576 = vpop.permute.xlu0 %1575
      %1577 = vrot.lane.b32.xlu0 %v221, 24
      %v1578 = vpop.permute.xlu0 %1577
      %1579 = vrot.lane.b32.xlu0 %v223, 24
      %v1580 = vpop.permute.xlu0 %1579
      %1581 = vrot.lane.b32.xlu0 %v224, 24
      %v1582 = vpop.permute.xlu0 %1581
      %1583 = vrot.lane.b32.xlu0 %v226, 24
      %v1584 = vpop.permute.xlu0 %1583
      %1585 = vrot.lane.b32.xlu0 %v227, 24
      %v1586 = vpop.permute.xlu0 %1585
      %1587 = vrot.lane.b32.xlu0 %v229, 24
      %v1588 = vpop.permute.xlu0 %1587
      %1589 = vrot.lane.b32.xlu0 %v230, 24
      %v1590 = vpop.permute.xlu0 %1589
      %1591 = vrot.lane.b32.xlu0 %v232, 24
      %v1592 = vpop.permute.xlu0 %1591
      %1593 = vrot.lane.b32.xlu0 %v233, 24
      %v1594 = vpop.permute.xlu0 %1593
      %1595 = vrot.lane.b32.xlu0 %v235, 24
      %v1596 = vpop.permute.xlu0 %1595
      %1597 = vrot.lane.b32.xlu0 %v236, 24
      %v1598 = vpop.permute.xlu0 %1597
      %vm1631 = vcmask 224448
      %1632 = vst.msk [vmem:[#allocation2] sm:$0xf] %vm1631, %v1536
      %1633 = vst.msk [vmem:[#allocation2 + $0x4] sm:$0xf] %vm1631, %v1538
      %1634 = vst.msk [vmem:[#allocation2 + $0x8] sm:$0xf] %vm1631, %v1540
      %1635 = vst.msk [vmem:[#allocation2 + $0xc] sm:$0xf] %vm1631, %v1542
      %1636 = vst.msk [vmem:[#allocation2 + $0x10] sm:$0xf] %vm1631, %v1544
      %1637 = vst.msk [vmem:[#allocation2 + $0x14] sm:$0xf] %vm1631, %v1546
      %1638 = vst.msk [vmem:[#allocation2 + $0x18] sm:$0xf] %vm1631, %v1548
      %1639 = vst.msk [vmem:[#allocation2 + $0x1c] sm:$0xf] %vm1631, %v1550
      %1640 = vst.msk [vmem:[#allocation2 + $0x20] sm:$0xf] %vm1631, %v1552
      %1641 = vst.msk [vmem:[#allocation2 + $0x24] sm:$0xf] %vm1631, %v1554
      %1642 = vst.msk [vmem:[#allocation2 + $0x28] sm:$0xf] %vm1631, %v1556
      %1643 = vst.msk [vmem:[#allocation2 + $0x2c] sm:$0xf] %vm1631, %v1558
      %1644 = vst.msk [vmem:[#allocation2 + $0x30] sm:$0xf] %vm1631, %v1560
      %1645 = vst.msk [vmem:[#allocation2 + $0x34] sm:$0xf] %vm1631, %v1562
      %1646 = vst.msk [vmem:[#allocation2 + $0x38] sm:$0xf] %vm1631, %v1564
      %1647 = vst.msk [vmem:[#allocation2 + $0x3c] sm:$0xf] %vm1631, %v1566
      %1648 = vst.msk [vmem:[#allocation2 + $0x40] sm:$0xf] %vm1631, %v1568
      %1649 = vst.msk [vmem:[#allocation2 + $0x44] sm:$0xf] %vm1631, %v1570
      %1650 = vst.msk [vmem:[#allocation2 + $0x48] sm:$0xf] %vm1631, %v1572
      %1651 = vst.msk [vmem:[#allocation2 + $0x4c] sm:$0xf] %vm1631, %v1574
      %1652 = vst.msk [vmem:[#allocation2 + $0x50] sm:$0xf] %vm1631, %v1576
      %1653 = vst.msk [vmem:[#allocation2 + $0x54] sm:$0xf] %vm1631, %v1578
      %1654 = vst.msk [vmem:[#allocation2 + $0x58] sm:$0xf] %vm1631, %v1580
      %1655 = vst.msk [vmem:[#allocation2 + $0x5c] sm:$0xf] %vm1631, %v1582
      %1656 = vst.msk [vmem:[#allocation2 + $0x60] sm:$0xf] %vm1631, %v1584
      %1657 = vst.msk [vmem:[#allocation2 + $0x64] sm:$0xf] %vm1631, %v1586
      %1658 = vst.msk [vmem:[#allocation2 + $0x68] sm:$0xf] %vm1631, %v1588
      %1659 = vst.msk [vmem:[#allocation2 + $0x6c] sm:$0xf] %vm1631, %v1590
      %1660 = vst.msk [vmem:[#allocation2 + $0x70] sm:$0xf] %vm1631, %v1592
      %1661 = vst.msk [vmem:[#allocation2 + $0x74] sm:$0xf] %vm1631, %v1594
      %1662 = vst.msk [vmem:[#allocation2 + $0x78] sm:$0xf] %vm1631, %v1596
      %1663 = vst.msk [vmem:[#allocation2 + $0x7c] sm:$0xf] %vm1631, %v1598
      %v1665 = vshrl.u32 %v235, 16
      %v1667 = vrot.slane %v1665, 4
      %v1668 = vshll.u32 %v235, 16
      %v1670 = vrot.slane %v1668, 5
      %v1671 = vor.u32 %v1667, %v1670
      %v1672 = vrot.slane %v1671, 4
      %v1674 = vshll.u32 %v236, 16
      %v1676 = vrot.slane %v1674, 5
      %v1677 = vsel %vm306, %v1672, %v1676
      %v1678 = vshrl.u32 %v236, 16
      %v1680 = vrot.slane %v1678, 4
      %v1681 = vor.u32 %v1680, %v1676
      %v1682 = vrot.slane %v1681, 4
      %v1684 = vshll.u32 %v237, 16
      %v1686 = vrot.slane %v1684, 5
      %v1687 = vsel %vm306, %v1682, %v1686
      %1688 = vrot.lane.b32.xlu0 %v368, 28
      %v1689 = vpop.permute.xlu0 %1688
      %1690 = vrot.lane.b32.xlu0 %v378, 28
      %v1691 = vpop.permute.xlu0 %1690
      %1692 = vrot.lane.b32.xlu0 %v392, 28
      %v1693 = vpop.permute.xlu0 %1692
      %1694 = vrot.lane.b32.xlu0 %v402, 28
      %v1695 = vpop.permute.xlu0 %1694
      %1696 = vrot.lane.b32.xlu0 %v416, 28
      %v1697 = vpop.permute.xlu0 %1696
      %1698 = vrot.lane.b32.xlu0 %v426, 28
      %v1699 = vpop.permute.xlu0 %1698
      %1700 = vrot.lane.b32.xlu0 %v440, 28
      %v1701 = vpop.permute.xlu0 %1700
      %1702 = vrot.lane.b32.xlu0 %v450, 28
      %v1703 = vpop.permute.xlu0 %1702
      %1704 = vrot.lane.b32.xlu0 %v464, 28
      %v1705 = vpop.permute.xlu0 %1704
      %1706 = vrot.lane.b32.xlu0 %v474, 28
      %v1707 = vpop.permute.xlu0 %1706
      %1708 = vrot.lane.b32.xlu0 %v488, 28
      %v1709 = vpop.permute.xlu0 %1708
      %1710 = vrot.lane.b32.xlu0 %v498, 28
      %v1711 = vpop.permute.xlu0 %1710
      %1712 = vrot.lane.b32.xlu0 %v512, 28
      %v1713 = vpop.permute.xlu0 %1712
      %1714 = vrot.lane.b32.xlu0 %v522, 28
      %v1715 = vpop.permute.xlu0 %1714
      %1716 = vrot.lane.b32.xlu0 %v536, 28
      %v1717 = vpop.permute.xlu0 %1716
      %1718 = vrot.lane.b32.xlu0 %v546, 28
      %v1719 = vpop.permute.xlu0 %1718
      %1720 = vrot.lane.b32.xlu0 %v560, 28
      %v1721 = vpop.permute.xlu0 %1720
      %1722 = vrot.lane.b32.xlu0 %v570, 28
      %v1723 = vpop.permute.xlu0 %1722
      %1724 = vrot.lane.b32.xlu0 %v584, 28
      %v1725 = vpop.permute.xlu0 %1724
      %1726 = vrot.lane.b32.xlu0 %v594, 28
      %v1727 = vpop.permute.xlu0 %1726
      %1728 = vrot.lane.b32.xlu0 %v608, 28
      %v1729 = vpop.permute.xlu0 %1728
      %1730 = vrot.lane.b32.xlu0 %v618, 28
      %v1731 = vpop.permute.xlu0 %1730
      %1732 = vrot.lane.b32.xlu0 %v632, 28
      %v1733 = vpop.permute.xlu0 %1732
      %1734 = vrot.lane.b32.xlu0 %v642, 28
      %v1735 = vpop.permute.xlu0 %1734
      %1736 = vrot.lane.b32.xlu0 %v656, 28
      %v1737 = vpop.permute.xlu0 %1736
      %1738 = vrot.lane.b32.xlu0 %v666, 28
      %v1739 = vpop.permute.xlu0 %1738
      %1740 = vrot.lane.b32.xlu0 %v680, 28
      %v1741 = vpop.permute.xlu0 %1740
      %1742 = vrot.lane.b32.xlu0 %v690, 28
      %v1743 = vpop.permute.xlu0 %1742
      %1744 = vrot.lane.b32.xlu0 %v1256, 28
      %v1745 = vpop.permute.xlu0 %1744
      %1746 = vrot.lane.b32.xlu0 %v1266, 28
      %v1747 = vpop.permute.xlu0 %1746
      %1748 = vrot.lane.b32.xlu0 %v1677, 28
      %v1749 = vpop.permute.xlu0 %1748
      %1750 = vrot.lane.b32.xlu0 %v1687, 28
      %v1751 = vpop.permute.xlu0 %1750
      %vm1784 = vcmask 257248
      %1785 = vst.msk [vmem:[#allocation2] sm:$0xf] %vm1784, %v1689
      %1786 = vst.msk [vmem:[#allocation2 + $0x4] sm:$0xf] %vm1784, %v1691
      %1787 = vst.msk [vmem:[#allocation2 + $0x8] sm:$0xf] %vm1784, %v1693
      %1788 = vst.msk [vmem:[#allocation2 + $0xc] sm:$0xf] %vm1784, %v1695
      %1789 = vst.msk [vmem:[#allocation2 + $0x10] sm:$0xf] %vm1784, %v1697
      %1790 = vst.msk [vmem:[#allocation2 + $0x14] sm:$0xf] %vm1784, %v1699
      %1791 = vst.msk [vmem:[#allocation2 + $0x18] sm:$0xf] %vm1784, %v1701
      %1792 = vst.msk [vmem:[#allocation2 + $0x1c] sm:$0xf] %vm1784, %v1703
      %1793 = vst.msk [vmem:[#allocation2 + $0x20] sm:$0xf] %vm1784, %v1705
      %1794 = vst.msk [vmem:[#allocation2 + $0x24] sm:$0xf] %vm1784, %v1707
      %1795 = vst.msk [vmem:[#allocation2 + $0x28] sm:$0xf] %vm1784, %v1709
      %1796 = vst.msk [vmem:[#allocation2 + $0x2c] sm:$0xf] %vm1784, %v1711
      %1797 = vst.msk [vmem:[#allocation2 + $0x30] sm:$0xf] %vm1784, %v1713
      %1798 = vst.msk [vmem:[#allocation2 + $0x34] sm:$0xf] %vm1784, %v1715
      %1799 = vst.msk [vmem:[#allocation2 + $0x38] sm:$0xf] %vm1784, %v1717
      %1800 = vst.msk [vmem:[#allocation2 + $0x3c] sm:$0xf] %vm1784, %v1719
      %1801 = vst.msk [vmem:[#allocation2 + $0x40] sm:$0xf] %vm1784, %v1721
      %1802 = vst.msk [vmem:[#allocation2 + $0x44] sm:$0xf] %vm1784, %v1723
      %1803 = vst.msk [vmem:[#allocation2 + $0x48] sm:$0xf] %vm1784, %v1725
      %1804 = vst.msk [vmem:[#allocation2 + $0x4c] sm:$0xf] %vm1784, %v1727
      %1805 = vst.msk [vmem:[#allocation2 + $0x50] sm:$0xf] %vm1784, %v1729
      %1806 = vst.msk [vmem:[#allocation2 + $0x54] sm:$0xf] %vm1784, %v1731
      %1807 = vst.msk [vmem:[#allocation2 + $0x58] sm:$0xf] %vm1784, %v1733
      %1808 = vst.msk [vmem:[#allocation2 + $0x5c] sm:$0xf] %vm1784, %v1735
      %1809 = vst.msk [vmem:[#allocation2 + $0x60] sm:$0xf] %vm1784, %v1737
      %1810 = vst.msk [vmem:[#allocation2 + $0x64] sm:$0xf] %vm1784, %v1739
      %1811 = vst.msk [vmem:[#allocation2 + $0x68] sm:$0xf] %vm1784, %v1741
      %1812 = vst.msk [vmem:[#allocation2 + $0x6c] sm:$0xf] %vm1784, %v1743
      %1813 = vst.msk [vmem:[#allocation2 + $0x70] sm:$0xf] %vm1784, %v1745
      %1814 = vst.msk [vmem:[#allocation2 + $0x74] sm:$0xf] %vm1784, %v1747
      %1815 = vst.msk [vmem:[#allocation2 + $0x78] sm:$0xf] %vm1784, %v1749
      %1816 = vst.msk [vmem:[#allocation2 + $0x7c] sm:$0xf] %vm1784, %v1751
      %v1818 = vrot.slane %v235, 5
      %v1819 = vrot.slane %v1818, 4
      %v1820 = vrot.slane %v236, 5
      %v1821 = vsel %vm870, %v1819, %v1820
      %v1822 = vrot.slane %v1820, 4
      %v1823 = vrot.slane %v237, 5
      %v1824 = vsel %vm870, %v1822, %v1823
      %1825 = vrot.lane.b32.xlu0 %v888, 32
      %v1826 = vpop.permute.xlu0 %1825
      %1827 = vrot.lane.b32.xlu0 %v891, 32
      %v1828 = vpop.permute.xlu0 %1827
      %1829 = vrot.lane.b32.xlu0 %v895, 32
      %v1830 = vpop.permute.xlu0 %1829
      %1831 = vrot.lane.b32.xlu0 %v898, 32
      %v1832 = vpop.permute.xlu0 %1831
      %1833 = vrot.lane.b32.xlu0 %v902, 32
      %v1834 = vpop.permute.xlu0 %1833
      %1835 = vrot.lane.b32.xlu0 %v905, 32
      %v1836 = vpop.permute.xlu0 %1835
      %1837 = vrot.lane.b32.xlu0 %v909, 32
      %v1838 = vpop.permute.xlu0 %1837
      %1839 = vrot.lane.b32.xlu0 %v912, 32
      %v1840 = vpop.permute.xlu0 %1839
      %1841 = vrot.lane.b32.xlu0 %v916, 32
      %v1842 = vpop.permute.xlu0 %1841
      %1843 = vrot.lane.b32.xlu0 %v919, 32
      %v1844 = vpop.permute.xlu0 %1843
      %1845 = vrot.lane.b32.xlu0 %v923, 32
      %v1846 = vpop.permute.xlu0 %1845
      %1847 = vrot.lane.b32.xlu0 %v926, 32
      %v1848 = vpop.permute.xlu0 %1847
      %1849 = vrot.lane.b32.xlu0 %v930, 32
      %v1850 = vpop.permute.xlu0 %1849
      %1851 = vrot.lane.b32.xlu0 %v933, 32
      %v1852 = vpop.permute.xlu0 %1851
      %1853 = vrot.lane.b32.xlu0 %v937, 32
      %v1854 = vpop.permute.xlu0 %1853
      %1855 = vrot.lane.b32.xlu0 %v940, 32
      %v1856 = vpop.permute.xlu0 %1855
      %1857 = vrot.lane.b32.xlu0 %v944, 32
      %v1858 = vpop.permute.xlu0 %1857
      %1859 = vrot.lane.b32.xlu0 %v947, 32
      %v1860 = vpop.permute.xlu0 %1859
      %1861 = vrot.lane.b32.xlu0 %v951, 32
      %v1862 = vpop.permute.xlu0 %1861
      %1863 = vrot.lane.b32.xlu0 %v954, 32
      %v1864 = vpop.permute.xlu0 %1863
      %1865 = vrot.lane.b32.xlu0 %v958, 32
      %v1866 = vpop.permute.xlu0 %1865
      %1867 = vrot.lane.b32.xlu0 %v961, 32
      %v1868 = vpop.permute.xlu0 %1867
      %1869 = vrot.lane.b32.xlu0 %v965, 32
      %v1870 = vpop.permute.xlu0 %1869
      %1871 = vrot.lane.b32.xlu0 %v968, 32
      %v1872 = vpop.permute.xlu0 %1871
      %1873 = vrot.lane.b32.xlu0 %v972, 32
      %v1874 = vpop.permute.xlu0 %1873
      %1875 = vrot.lane.b32.xlu0 %v975, 32
      %v1876 = vpop.permute.xlu0 %1875
      %1877 = vrot.lane.b32.xlu0 %v979, 32
      %v1878 = vpop.permute.xlu0 %1877
      %1879 = vrot.lane.b32.xlu0 %v982, 32
      %v1880 = vpop.permute.xlu0 %1879
      %1881 = vrot.lane.b32.xlu0 %v1400, 32
      %v1882 = vpop.permute.xlu0 %1881
      %1883 = vrot.lane.b32.xlu0 %v1403, 32
      %v1884 = vpop.permute.xlu0 %1883
      %1885 = vrot.lane.b32.xlu0 %v1821, 32
      %v1886 = vpop.permute.xlu0 %1885
      %1887 = vrot.lane.b32.xlu0 %v1824, 32
      %v1888 = vpop.permute.xlu0 %1887
      %vm1921 = vcmask 290048
      %1922 = vst.msk [vmem:[#allocation2] sm:$0xf] %vm1921, %v1826
      %1923 = vst.msk [vmem:[#allocation2 + $0x4] sm:$0xf] %vm1921, %v1828
      %1924 = vst.msk [vmem:[#allocation2 + $0x8] sm:$0xf] %vm1921, %v1830
      %1925 = vst.msk [vmem:[#allocation2 + $0xc] sm:$0xf] %vm1921, %v1832
      %1926 = vst.msk [vmem:[#allocation2 + $0x10] sm:$0xf] %vm1921, %v1834
      %1927 = vst.msk [vmem:[#allocation2 + $0x14] sm:$0xf] %vm1921, %v1836
      %1928 = vst.msk [vmem:[#allocation2 + $0x18] sm:$0xf] %vm1921, %v1838
      %1929 = vst.msk [vmem:[#allocation2 + $0x1c] sm:$0xf] %vm1921, %v1840
      %1930 = vst.msk [vmem:[#allocation2 + $0x20] sm:$0xf] %vm1921, %v1842
      %1931 = vst.msk [vmem:[#allocation2 + $0x24] sm:$0xf] %vm1921, %v1844
      %1932 = vst.msk [vmem:[#allocation2 + $0x28] sm:$0xf] %vm1921, %v1846
      %1933 = vst.msk [vmem:[#allocation2 + $0x2c] sm:$0xf] %vm1921, %v1848
      %1934 = vst.msk [vmem:[#allocation2 + $0x30] sm:$0xf] %vm1921, %v1850
      %1935 = vst.msk [vmem:[#allocation2 + $0x34] sm:$0xf] %vm1921, %v1852
      %1936 = vst.msk [vmem:[#allocation2 + $0x38] sm:$0xf] %vm1921, %v1854
      %1937 = vst.msk [vmem:[#allocation2 + $0x3c] sm:$0xf] %vm1921, %v1856
      %1938 = vst.msk [vmem:[#allocation2 + $0x40] sm:$0xf] %vm1921, %v1858
      %1939 = vst.msk [vmem:[#allocation2 + $0x44] sm:$0xf] %vm1921, %v1860
      %1940 = vst.msk [vmem:[#allocation2 + $0x48] sm:$0xf] %vm1921, %v1862
      %1941 = vst.msk [vmem:[#allocation2 + $0x4c] sm:$0xf] %vm1921, %v1864
      %1942 = vst.msk [vmem:[#allocation2 + $0x50] sm:$0xf] %vm1921, %v1866
      %1943 = vst.msk [vmem:[#allocation2 + $0x54] sm:$0xf] %vm1921, %v1868
      %1944 = vst.msk [vmem:[#allocation2 + $0x58] sm:$0xf] %vm1921, %v1870
      %1945 = vst.msk [vmem:[#allocation2 + $0x5c] sm:$0xf] %vm1921, %v1872
      %1946 = vst.msk [vmem:[#allocation2 + $0x60] sm:$0xf] %vm1921, %v1874
      %1947 = vst.msk [vmem:[#allocation2 + $0x64] sm:$0xf] %vm1921, %v1876
      %1948 = vst.msk [vmem:[#allocation2 + $0x68] sm:$0xf] %vm1921, %v1878
      %1949 = vst.msk [vmem:[#allocation2 + $0x6c] sm:$0xf] %vm1921, %v1880
      %1950 = vst.msk [vmem:[#allocation2 + $0x70] sm:$0xf] %vm1921, %v1882
      %1951 = vst.msk [vmem:[#allocation2 + $0x74] sm:$0xf] %vm1921, %v1884
      %1952 = vst.msk [vmem:[#allocation2 + $0x78] sm:$0xf] %vm1921, %v1886
      %1953 = vst.msk [vmem:[#allocation2 + $0x7c] sm:$0xf] %vm1921, %v1888
      %v1954 = vld [vmem:[#allocation2] sm:$0xf]
      %v1955 = vld [vmem:[#allocation2 + $0x4] sm:$0xf]
      %v1956 = vld [vmem:[#allocation2 + $0x8] sm:$0xf]
      %v1957 = vld [vmem:[#allocation2 + $0xc] sm:$0xf]
      %v1958 = vld [vmem:[#allocation2 + $0x10] sm:$0xf]
      %v1959 = vld [vmem:[#allocation2 + $0x14] sm:$0xf]
      %v1960 = vld [vmem:[#allocation2 + $0x18] sm:$0xf]
      %v1961 = vld [vmem:[#allocation2 + $0x1c] sm:$0xf]
      %v1962 = vld [vmem:[#allocation2 + $0x20] sm:$0xf]
      %v1963 = vld [vmem:[#allocation2 + $0x24] sm:$0xf]
      %v1964 = vld [vmem:[#allocation2 + $0x28] sm:$0xf]
      %v1965 = vld [vmem:[#allocation2 + $0x2c] sm:$0xf]
      %v1966 = vld [vmem:[#allocation2 + $0x30] sm:$0xf]
      %v1967 = vld [vmem:[#allocation2 + $0x34] sm:$0xf]
      %v1968 = vld [vmem:[#allocation2 + $0x38] sm:$0xf]
      %v1969 = vld [vmem:[#allocation2 + $0x3c] sm:$0xf]
      %v1970 = vld [vmem:[#allocation2 + $0x40] sm:$0xf]
      %v1971 = vld [vmem:[#allocation2 + $0x44] sm:$0xf]
      %v1972 = vld [vmem:[#allocation2 + $0x48] sm:$0xf]
      %v1973 = vld [vmem:[#allocation2 + $0x4c] sm:$0xf]
      %v1974 = vld [vmem:[#allocation2 + $0x50] sm:$0xf]
      %v1975 = vld [vmem:[#allocation2 + $0x54] sm:$0xf]
      %v1976 = vld [vmem:[#allocation2 + $0x58] sm:$0xf]
      %v1977 = vld [vmem:[#allocation2 + $0x5c] sm:$0xf]
      %v1978 = vld [vmem:[#allocation2 + $0x60] sm:$0xf]
      %v1979 = vld [vmem:[#allocation2 + $0x64] sm:$0xf]
      %v1980 = vld [vmem:[#allocation2 + $0x68] sm:$0xf]
      %v1981 = vld [vmem:[#allocation2 + $0x6c] sm:$0xf]
      %v1982 = vld [vmem:[#allocation2 + $0x70] sm:$0xf]
      %v1983 = vld [vmem:[#allocation2 + $0x74] sm:$0xf]
      %v1984 = vld [vmem:[#allocation2 + $0x78] sm:$0xf]
      %v1985 = vld [vmem:[#allocation2 + $0x7c] sm:$0xf]
      %v1986 = vld [vmem:[%s1] sm:$0xf]
      %v1987 = vld [vmem:[%s1 + $0x4] sm:$0xf]
      %v1988 = vld [vmem:[%s1 + $0x8] sm:$0xf]
      %v1989 = vld [vmem:[%s1 + $0xc] sm:$0xf]
      %v1990 = vld [vmem:[%s1 + $0x10] sm:$0xf]
      %v1991 = vld [vmem:[%s1 + $0x14] sm:$0xf]
      %v1992 = vld [vmem:[%s1 + $0x18] sm:$0xf]
      %v1993 = vld [vmem:[%s1 + $0x1c] sm:$0xf]
      %v1994 = vld [vmem:[%s1 + $0x20] sm:$0xf]
      %v1995 = vld [vmem:[%s1 + $0x24] sm:$0xf]
      %v1996 = vld [vmem:[%s1 + $0x28] sm:$0xf]
      %v1997 = vld [vmem:[%s1 + $0x2c] sm:$0xf]
      %v1998 = vld [vmem:[%s1 + $0x30] sm:$0xf]
      %v1999 = vld [vmem:[%s1 + $0x34] sm:$0xf]
      %v2000 = vld [vmem:[%s1 + $0x38] sm:$0xf]
      %v2001 = vld [vmem:[%s1 + $0x3c] sm:$0xf]
      %v2034 = vunpack.c.l.b16 %v1954
      %v2035 = vunpack.c.l.b16 %v1955
      %v2036 = vunpack.c.l.b16 %v1956
      %v2037 = vunpack.c.l.b16 %v1957
      %v2038 = vunpack.c.l.b16 %v1958
      %v2039 = vunpack.c.l.b16 %v1959
      %v2040 = vunpack.c.l.b16 %v1960
      %v2041 = vunpack.c.l.b16 %v1961
      %v2042 = vunpack.c.l.b16 %v1962
      %v2043 = vunpack.c.l.b16 %v1963
      %v2044 = vunpack.c.l.b16 %v1964
      %v2045 = vunpack.c.l.b16 %v1965
      %v2046 = vunpack.c.l.b16 %v1966
      %v2047 = vunpack.c.l.b16 %v1967
      %v2048 = vunpack.c.l.b16 %v1968
      %v2049 = vunpack.c.l.b16 %v1969
      %v2050 = vunpack.c.l.b16 %v1970
      %v2051 = vunpack.c.l.b16 %v1971
      %v2052 = vunpack.c.l.b16 %v1972
      %v2053 = vunpack.c.l.b16 %v1973
      %v2054 = vunpack.c.l.b16 %v1974
      %v2055 = vunpack.c.l.b16 %v1975
      %v2056 = vunpack.c.l.b16 %v1976
      %v2057 = vunpack.c.l.b16 %v1977
      %v2058 = vunpack.c.l.b16 %v1978
      %v2059 = vunpack.c.l.b16 %v1979
      %v2060 = vunpack.c.l.b16 %v1980
      %v2061 = vunpack.c.l.b16 %v1981
      %v2062 = vunpack.c.l.b16 %v1982
      %v2063 = vunpack.c.l.b16 %v1983
      %v2064 = vunpack.c.l.b16 %v1984
      %v2065 = vunpack.c.l.b16 %v1985
      %v2066 = vpack.c.b16 %v2035, %v2034
      %v2067 = vpack.c.b16 %v2037, %v2036
      %v2068 = vpack.c.b16 %v2039, %v2038
      %v2069 = vpack.c.b16 %v2041, %v2040
      %v2070 = vpack.c.b16 %v2043, %v2042
      %v2071 = vpack.c.b16 %v2045, %v2044
      %v2072 = vpack.c.b16 %v2047, %v2046
      %v2073 = vpack.c.b16 %v2049, %v2048
      %v2074 = vpack.c.b16 %v2051, %v2050
      %v2075 = vpack.c.b16 %v2053, %v2052
      %v2076 = vpack.c.b16 %v2055, %v2054
      %v2077 = vpack.c.b16 %v2057, %v2056
      %v2078 = vpack.c.b16 %v2059, %v2058
      %v2079 = vpack.c.b16 %v2061, %v2060
      %v2080 = vpack.c.b16 %v2063, %v2062
      %v2081 = vpack.c.b16 %v2065, %v2064
      %v2114 = vunpack.c.l.b16 %v1986
      %v2115 = vunpack.c.l.b16 %v1987
      %v2116 = vunpack.c.l.b16 %v1988
      %v2117 = vunpack.c.l.b16 %v1989
      %v2118 = vunpack.c.l.b16 %v1990
      %v2119 = vunpack.c.l.b16 %v1991
      %v2120 = vunpack.c.l.b16 %v1992
      %v2121 = vunpack.c.l.b16 %v1993
      %v2122 = vunpack.c.l.b16 %v1994
      %v2123 = vunpack.c.l.b16 %v1995
      %v2124 = vunpack.c.l.b16 %v1996
      %v2125 = vunpack.c.l.b16 %v1997
      %v2126 = vunpack.c.l.b16 %v1998
      %v2127 = vunpack.c.l.b16 %v1999
      %v2128 = vunpack.c.l.b16 %v2000
      %v2129 = vunpack.c.l.b16 %v2001
      %v2130 = vpack.c.b16 %v2115, %v2114
      %v2131 = vpack.c.b16 %v2117, %v2116
      %v2132 = vpack.c.b16 %v2119, %v2118
      %v2133 = vpack.c.b16 %v2121, %v2120
      %v2134 = vpack.c.b16 %v2123, %v2122
      %v2135 = vpack.c.b16 %v2125, %v2124
      %v2136 = vpack.c.b16 %v2127, %v2126
      %v2137 = vpack.c.b16 %v2129, %v2128
      %2146 = vmatprep.subr.bf16.mxu0 0
      %2147 = vmatpush1.bf16.msra.mxu0 %v2137
      %2148 = vmatprep.subr.bf16.mxu0 0
      %2149 = vmatpush1.bf16.msra.mxu0 %v2136
      %2150 = vmatprep.subr.bf16.mxu0 0
      %2151 = vmatpush1.bf16.msra.mxu0 %v2135
      %2152 = vmatprep.subr.bf16.mxu0 0
      %2153 = vmatpush1.bf16.msra.mxu0 %v2134
      %2154 = vmatprep.subr.bf16.mxu0 0
      %2155 = vmatpush1.bf16.msra.mxu0 %v2133
      %2156 = vmatprep.subr.bf16.mxu0 0
      %2157 = vmatpush1.bf16.msra.mxu0 %v2132
      %2158 = vmatprep.subr.bf16.mxu0 0
      %2159 = vmatpush1.bf16.msra.mxu0 %v2131
      %2160 = vmatprep.subr.bf16.mxu0 0
      %2161 = vmatpush1.bf16.msra.mxu0 %v2130
      %2162 = vmatprep.subr.bf16.mxu0 0
      %2163 = vmatpush2.bf16.msra.mxu0 0
      %2164 = vmatprep.subr.bf16.mxu0 0
      %2165 = vmatpush2.bf16.msra.mxu0 0
      %2166 = vmatprep.subr.bf16.mxu0 0
      %2167 = vmatpush2.bf16.msra.mxu0 0
      %2168 = vmatprep.subr.bf16.mxu0 0
      %2169 = vmatpush2.bf16.msra.mxu0 0
      %2170 = vmatprep.subr.bf16.mxu0 0
      %2171 = vmatpush2.bf16.msra.mxu0 0
      %2172 = vmatprep.subr.bf16.mxu0 0
      %2173 = vmatpush2.bf16.msra.mxu0 0
      %2174 = vmatprep.subr.bf16.mxu0 0
      %2175 = vmatpush2.bf16.msra.mxu0 0
      %2176 = vmatprep.subr.bf16.mxu0 0
      %2177 = vmatpush2.bf16.msra.mxu0 0
      %2178 = vmatprep.mubr.bf16.mxu0 0
      %2179 = vmatmul.mubr.bf16.gmra.mxu0 %v2066
      %v2180 = vpop.f32.mrf.mxu0
      %v2181 = vadd.f32 0.0, %v2180
      %v2182 = vpop.f32.mrf.mxu0
      %v2183 = vpop.f32.mrf.mxu0
      %v2184 = vadd.f32 0.0, %v2183
      %v2185 = vpop.f32.mrf.mxu0
      %2186 = vmatprep.mubr.bf16.mxu0 0
      %2187 = vmatmul.mubr.bf16.gmra.mxu0 %v2067
      %v2188 = vpop.f32.mrf.mxu0
      %v2189 = vadd.f32 0.0, %v2188
      %v2190 = vpop.f32.mrf.mxu0
      %v2191 = vpop.f32.mrf.mxu0
      %v2192 = vadd.f32 0.0, %v2191
      %v2193 = vpop.f32.mrf.mxu0
      %2194 = vmatprep.mubr.bf16.mxu0 0
      %2195 = vmatmul.mubr.bf16.gmra.mxu0 %v2068
      %v2196 = vpop.f32.mrf.mxu0
      %v2197 = vadd.f32 0.0, %v2196
      %v2198 = vpop.f32.mrf.mxu0
      %v2199 = vpop.f32.mrf.mxu0
      %v2200 = vadd.f32 0.0, %v2199
      %v2201 = vpop.f32.mrf.mxu0
      %2202 = vmatprep.mubr.bf16.mxu0 0
      %2203 = vmatmul.mubr.bf16.gmra.mxu0 %v2069
      %v2204 = vpop.f32.mrf.mxu0
      %v2205 = vadd.f32 0.0, %v2204
      %v2206 = vpop.f32.mrf.mxu0
      %v2207 = vpop.f32.mrf.mxu0
      %v2208 = vadd.f32 0.0, %v2207
      %v2209 = vpop.f32.mrf.mxu0
      %2210 = vmatprep.mubr.bf16.mxu0 0
      %2211 = vmatmul.mubr.bf16.gmra.mxu0 %v2070
      %v2212 = vpop.f32.mrf.mxu0
      %v2213 = vadd.f32 0.0, %v2212
      %v2214 = vpop.f32.mrf.mxu0
      %v2215 = vpop.f32.mrf.mxu0
      %v2216 = vadd.f32 0.0, %v2215
      %v2217 = vpop.f32.mrf.mxu0
      %2218 = vmatprep.mubr.bf16.mxu0 0
      %2219 = vmatmul.mubr.bf16.gmra.mxu0 %v2071
      %v2220 = vpop.f32.mrf.mxu0
      %v2221 = vadd.f32 0.0, %v2220
      %v2222 = vpop.f32.mrf.mxu0
      %v2223 = vpop.f32.mrf.mxu0
      %v2224 = vadd.f32 0.0, %v2223
      %v2225 = vpop.f32.mrf.mxu0
      %2226 = vmatprep.mubr.bf16.mxu0 0
      %2227 = vmatmul.mubr.bf16.gmra.mxu0 %v2072
      %v2228 = vpop.f32.mrf.mxu0
      %v2229 = vadd.f32 0.0, %v2228
      %v2230 = vpop.f32.mrf.mxu0
      %v2231 = vpop.f32.mrf.mxu0
      %v2232 = vadd.f32 0.0, %v2231
      %v2233 = vpop.f32.mrf.mxu0
      %2234 = vmatprep.mubr.bf16.mxu0 0
      %2235 = vmatmul.mubr.bf16.gmra.mxu0 %v2073
      %v2236 = vpop.f32.mrf.mxu0
      %v2237 = vadd.f32 0.0, %v2236
      %v2238 = vpop.f32.mrf.mxu0
      %v2239 = vpop.f32.mrf.mxu0
      %v2240 = vadd.f32 0.0, %v2239
      %v2241 = vpop.f32.mrf.mxu0
      %2242 = vmatprep.mubr.bf16.mxu0 0
      %2243 = vmatmul.mubr.bf16.gmra.mxu0 %v2074
      %v2244 = vpop.f32.mrf.mxu0
      %v2245 = vadd.f32 0.0, %v2244
      %v2246 = vpop.f32.mrf.mxu0
      %v2247 = vpop.f32.mrf.mxu0
      %v2248 = vadd.f32 0.0, %v2247
      %v2249 = vpop.f32.mrf.mxu0
      %2250 = vmatprep.mubr.bf16.mxu0 0
      %2251 = vmatmul.mubr.bf16.gmra.mxu0 %v2075
      %v2252 = vpop.f32.mrf.mxu0
      %v2253 = vadd.f32 0.0, %v2252
      %v2254 = vpop.f32.mrf.mxu0
      %v2255 = vpop.f32.mrf.mxu0
      %v2256 = vadd.f32 0.0, %v2255
      %v2257 = vpop.f32.mrf.mxu0
      %2258 = vmatprep.mubr.bf16.mxu0 0
      %2259 = vmatmul.mubr.bf16.gmra.mxu0 %v2076
      %v2260 = vpop.f32.mrf.mxu0
      %v2261 = vadd.f32 0.0, %v2260
      %v2262 = vpop.f32.mrf.mxu0
      %v2263 = vpop.f32.mrf.mxu0
      %v2264 = vadd.f32 0.0, %v2263
      %v2265 = vpop.f32.mrf.mxu0
      %2266 = vmatprep.mubr.bf16.mxu0 0
      %2267 = vmatmul.mubr.bf16.gmra.mxu0 %v2077
      %v2268 = vpop.f32.mrf.mxu0
      %v2269 = vadd.f32 0.0, %v2268
      %v2270 = vpop.f32.mrf.mxu0
      %v2271 = vpop.f32.mrf.mxu0
      %v2272 = vadd.f32 0.0, %v2271
      %v2273 = vpop.f32.mrf.mxu0
      %2274 = vmatprep.mubr.bf16.mxu0 0
      %2275 = vmatmul.mubr.bf16.gmra.mxu0 %v2078
      %v2276 = vpop.f32.mrf.mxu0
      %v2277 = vadd.f32 0.0, %v2276
      %v2278 = vpop.f32.mrf.mxu0
      %v2279 = vpop.f32.mrf.mxu0
      %v2280 = vadd.f32 0.0, %v2279
      %v2281 = vpop.f32.mrf.mxu0
      %2282 = vmatprep.mubr.bf16.mxu0 0
      %2283 = vmatmul.mubr.bf16.gmra.mxu0 %v2079
      %v2284 = vpop.f32.mrf.mxu0
      %v2285 = vadd.f32 0.0, %v2284
      %v2286 = vpop.f32.mrf.mxu0
      %v2287 = vpop.f32.mrf.mxu0
      %v2288 = vadd.f32 0.0, %v2287
      %v2289 = vpop.f32.mrf.mxu0
      %2290 = vmatprep.mubr.bf16.mxu0 0
      %2291 = vmatmul.mubr.bf16.gmra.mxu0 %v2080
      %v2292 = vpop.f32.mrf.mxu0
      %v2293 = vadd.f32 0.0, %v2292
      %v2294 = vpop.f32.mrf.mxu0
      %v2295 = vpop.f32.mrf.mxu0
      %v2296 = vadd.f32 0.0, %v2295
      %v2297 = vpop.f32.mrf.mxu0
      %2298 = vmatprep.mubr.bf16.mxu0 0
      %2299 = vmatmul.mubr.bf16.gmra.mxu0 %v2081
      %v2300 = vpop.f32.mrf.mxu0
      %v2301 = vadd.f32 0.0, %v2300
      %v2302 = vpop.f32.mrf.mxu0
      %v2303 = vpop.f32.mrf.mxu0
      %v2304 = vadd.f32 0.0, %v2303
      %v2305 = vpop.f32.mrf.mxu0
      %2306 = vdwg.mxu0
      %s2307 = smul.u32 %s15, 256
      %s2308 = scalar_lea.vmem %s4, %s2307
      %2309 = vst [vmem:[%s2308] sm:$0xff] %v2181
      %2310 = vst [vmem:[%s2308 + $0x8] sm:$0xff] %v2184
      %2311 = vst [vmem:[%s2308 + $0x10] sm:$0xff] %v2189
      %2312 = vst [vmem:[%s2308 + $0x18] sm:$0xff] %v2192
      %2313 = vst [vmem:[%s2308 + $0x20] sm:$0xff] %v2197
      %2314 = vst [vmem:[%s2308 + $0x28] sm:$0xff] %v2200
      %2315 = vst [vmem:[%s2308 + $0x30] sm:$0xff] %v2205
      %2316 = vst [vmem:[%s2308 + $0x38] sm:$0xff] %v2208
      %2317 = vst [vmem:[%s2308 + $0x40] sm:$0xff] %v2213
      %2318 = vst [vmem:[%s2308 + $0x48] sm:$0xff] %v2216
      %2319 = vst [vmem:[%s2308 + $0x50] sm:$0xff] %v2221
      %2320 = vst [vmem:[%s2308 + $0x58] sm:$0xff] %v2224
      %2321 = vst [vmem:[%s2308 + $0x60] sm:$0xff] %v2229
      %2322 = vst [vmem:[%s2308 + $0x68] sm:$0xff] %v2232
      %2323 = vst [vmem:[%s2308 + $0x70] sm:$0xff] %v2237
      %2324 = vst [vmem:[%s2308 + $0x78] sm:$0xff] %v2240
      %2325 = vst [vmem:[%s2308 + $0x80] sm:$0xff] %v2245
      %2326 = vst [vmem:[%s2308 + $0x88] sm:$0xff] %v2248
      %2327 = vst [vmem:[%s2308 + $0x90] sm:$0xff] %v2253
      %2328 = vst [vmem:[%s2308 + $0x98] sm:$0xff] %v2256
      %2329 = vst [vmem:[%s2308 + $0xa0] sm:$0xff] %v2261
      %2330 = vst [vmem:[%s2308 + $0xa8] sm:$0xff] %v2264
      %2331 = vst [vmem:[%s2308 + $0xb0] sm:$0xff] %v2269
      %2332 = vst [vmem:[%s2308 + $0xb8] sm:$0xff] %v2272
      %2333 = vst [vmem:[%s2308 + $0xc0] sm:$0xff] %v2277
      %2334 = vst [vmem:[%s2308 + $0xc8] sm:$0xff] %v2280
      %2335 = vst [vmem:[%s2308 + $0xd0] sm:$0xff] %v2285
      %2336 = vst [vmem:[%s2308 + $0xd8] sm:$0xff] %v2288
      %2337 = vst [vmem:[%s2308 + $0xe0] sm:$0xff] %v2293
      %2338 = vst [vmem:[%s2308 + $0xe8] sm:$0xff] %v2296
      %2339 = vst [vmem:[%s2308 + $0xf0] sm:$0xff] %v2301
      %2340 = vst [vmem:[%s2308 + $0xf8] sm:$0xff] %v2304
      %p2341 = scmp.eq.s32.totalorder %s15, 0
      // Predicated region
      $region37: #{conv_bn_act.1} parent=35 // pred_check
        %p2342 = pneg %p2341
      $region38: #{conv_bn_act.1} parent=35 // pred_check_branch
        %2344 = sbr.rel (%p2342) target = $region40
      $region39: #{conv_bn_act.1} parent=35 // pred_region
        %v2345 = vadd.f32 %v2181, %v2184
        %v2346 = vadd.f32 %v2345, %v2189
        %v2347 = vadd.f32 %v2346, %v2192
        %v2348 = vadd.f32 %v2347, %v2197
        %v2349 = vadd.f32 %v2348, %v2200
        %v2350 = vadd.f32 %v2349, %v2205
        %v2351 = vadd.f32 %v2350, %v2208
        %v2352 = vadd.f32 %v2351, %v2213
        %v2353 = vadd.f32 %v2352, %v2216
        %v2354 = vadd.f32 %v2353, %v2221
        %v2355 = vadd.f32 %v2354, %v2224
        %v2356 = vadd.f32 %v2355, %v2229
        %v2357 = vadd.f32 %v2356, %v2232
        %v2358 = vadd.f32 %v2357, %v2237
        %v2359 = vadd.f32 %v2358, %v2240
        %v2360 = vadd.f32 %v2359, %v2245
        %v2361 = vadd.f32 %v2360, %v2248
        %v2362 = vadd.f32 %v2361, %v2253
        %v2363 = vadd.f32 %v2362, %v2256
        %v2364 = vadd.f32 %v2363, %v2261
        %v2365 = vadd.f32 %v2364, %v2264
        %v2366 = vadd.f32 %v2365, %v2269
        %v2367 = vadd.f32 %v2366, %v2272
        %v2368 = vadd.f32 %v2367, %v2277
        %v2369 = vadd.f32 %v2368, %v2280
        %v2370 = vadd.f32 %v2369, %v2285
        %v2371 = vadd.f32 %v2370, %v2288
        %v2372 = vadd.f32 %v2371, %v2293
        %v2373 = vadd.f32 %v2372, %v2296
        %v2374 = vadd.f32 %v2373, %v2301
        %v2375 = vadd.f32 %v2374, %v2304
        %v2376 = vrot.slane %v2375, 4
        %v2377 = vadd.f32 %v2375, %v2376
        %v2378 = vrot.slane %v2377, 2
        %v2379 = vadd.f32 %v2377, %v2378
        %v2380 = vrot.slane %v2379, 1
        %v2381 = vadd.f32 %v2379, %v2380
        %v2382 = vmul.f32 %v2381, 0.00390625
        %2383 = vst [vmem:[#allocation5] sm:$0x1] %v2382
        %2384 = vst [vmem:[#allocation3] sm:$0x1] 0.0
        %2385 = vst [vmem:[#allocation4] sm:$0x1] 0.0
      $region40: #{conv_bn_act.1} parent=35 // pred_fallthru
        _
      %v2386 = vld [vmem:[#allocation5] sm:$0x1]
      %v2388 = vlaneseq
      %v2389 = vshrl.u32 %v2388, 7
      %v2390 = vsub.s32 0, %v2389
      %v2391 = vrot.slane %v2386, %v2390
      %v2393 = vsub.f32 %v2181, %v2391
      %v2394 = vsub.f32 %v2184, %v2391
      %v2395 = vsub.f32 %v2189, %v2391
      %v2396 = vsub.f32 %v2192, %v2391
      %v2397 = vsub.f32 %v2197, %v2391
      %v2398 = vsub.f32 %v2200, %v2391
      %v2399 = vsub.f32 %v2205, %v2391
      %v2400 = vsub.f32 %v2208, %v2391
      %v2401 = vsub.f32 %v2213, %v2391
      %v2402 = vsub.f32 %v2216, %v2391
      %v2403 = vsub.f32 %v2221, %v2391
      %v2404 = vsub.f32 %v2224, %v2391
      %v2405 = vsub.f32 %v2229, %v2391
      %v2406 = vsub.f32 %v2232, %v2391
      %v2407 = vsub.f32 %v2237, %v2391
      %v2408 = vsub.f32 %v2240, %v2391
      %v2409 = vsub.f32 %v2245, %v2391
      %v2410 = vsub.f32 %v2248, %v2391
      %v2411 = vsub.f32 %v2253, %v2391
      %v2412 = vsub.f32 %v2256, %v2391
      %v2413 = vsub.f32 %v2261, %v2391
      %v2414 = vsub.f32 %v2264, %v2391
      %v2415 = vsub.f32 %v2269, %v2391
      %v2416 = vsub.f32 %v2272, %v2391
      %v2417 = vsub.f32 %v2277, %v2391
      %v2418 = vsub.f32 %v2280, %v2391
      %v2419 = vsub.f32 %v2285, %v2391
      %v2420 = vsub.f32 %v2288, %v2391
      %v2421 = vsub.f32 %v2293, %v2391
      %v2422 = vsub.f32 %v2296, %v2391
      %v2423 = vsub.f32 %v2301, %v2391
      %v2424 = vsub.f32 %v2304, %v2391
      %v2425 = vld [vmem:[#allocation3] sm:$0x1]
      %v2426 = vadd.f32 %v2393, %v2394
      %v2427 = vadd.f32 %v2426, %v2395
      %v2428 = vadd.f32 %v2427, %v2396
      %v2429 = vadd.f32 %v2428, %v2397
      %v2430 = vadd.f32 %v2429, %v2398
      %v2431 = vadd.f32 %v2430, %v2399
      %v2432 = vadd.f32 %v2431, %v2400
      %v2433 = vadd.f32 %v2432, %v2401
      %v2434 = vadd.f32 %v2433, %v2402
      %v2435 = vadd.f32 %v2434, %v2403
      %v2436 = vadd.f32 %v2435, %v2404
      %v2437 = vadd.f32 %v2436, %v2405
      %v2438 = vadd.f32 %v2437, %v2406
      %v2439 = vadd.f32 %v2438, %v2407
      %v2440 = vadd.f32 %v2439, %v2408
      %v2441 = vadd.f32 %v2440, %v2409
      %v2442 = vadd.f32 %v2441, %v2410
      %v2443 = vadd.f32 %v2442, %v2411
      %v2444 = vadd.f32 %v2443, %v2412
      %v2445 = vadd.f32 %v2444, %v2413
      %v2446 = vadd.f32 %v2445, %v2414
      %v2447 = vadd.f32 %v2446, %v2415
      %v2448 = vadd.f32 %v2447, %v2416
      %v2449 = vadd.f32 %v2448, %v2417
      %v2450 = vadd.f32 %v2449, %v2418
      %v2451 = vadd.f32 %v2450, %v2419
      %v2452 = vadd.f32 %v2451, %v2420
      %v2453 = vadd.f32 %v2452, %v2421
      %v2454 = vadd.f32 %v2453, %v2422
      %v2455 = vadd.f32 %v2454, %v2423
      %v2456 = vadd.f32 %v2455, %v2424
      %v2457 = vrot.slane %v2456, 4
      %v2458 = vadd.f32 %v2456, %v2457
      %v2459 = vrot.slane %v2458, 2
      %v2460 = vadd.f32 %v2458, %v2459
      %v2461 = vrot.slane %v2460, 1
      %v2462 = vadd.f32 %v2460, %v2461
      %v2463 = vadd.f32 %v2425, %v2462
      %2464 = vst [vmem:[#allocation3] sm:$0x1] %v2463
      %v2465 = vld [vmem:[#allocation4] sm:$0x1]
      %v2466 = vmul.f32 %v2393, %v2393
      %v2467 = vmul.f32 %v2394, %v2394
      %v2468 = vmul.f32 %v2395, %v2395
      %v2469 = vmul.f32 %v2396, %v2396
      %v2470 = vmul.f32 %v2397, %v2397
      %v2471 = vmul.f32 %v2398, %v2398
      %v2472 = vmul.f32 %v2399, %v2399
      %v2473 = vmul.f32 %v2400, %v2400
      %v2474 = vmul.f32 %v2401, %v2401
      %v2475 = vmul.f32 %v2402, %v2402
      %v2476 = vmul.f32 %v2403, %v2403
      %v2477 = vmul.f32 %v2404, %v2404
      %v2478 = vmul.f32 %v2405, %v2405
      %v2479 = vmul.f32 %v2406, %v2406
      %v2480 = vmul.f32 %v2407, %v2407
      %v2481 = vmul.f32 %v2408, %v2408
      %v2482 = vmul.f32 %v2409, %v2409
      %v2483 = vmul.f32 %v2410, %v2410
      %v2484 = vmul.f32 %v2411, %v2411
      %v2485 = vmul.f32 %v2412, %v2412
      %v2486 = vmul.f32 %v2413, %v2413
      %v2487 = vmul.f32 %v2414, %v2414
      %v2488 = vmul.f32 %v2415, %v2415
      %v2489 = vmul.f32 %v2416, %v2416
      %v2490 = vmul.f32 %v2417, %v2417
      %v2491 = vmul.f32 %v2418, %v2418
      %v2492 = vmul.f32 %v2419, %v2419
      %v2493 = vmul.f32 %v2420, %v2420
      %v2494 = vmul.f32 %v2421, %v2421
      %v2495 = vmul.f32 %v2422, %v2422
      %v2496 = vmul.f32 %v2423, %v2423
      %v2497 = vmul.f32 %v2424, %v2424
      %v2498 = vadd.f32 %v2466, %v2467
      %v2499 = vadd.f32 %v2498, %v2468
      %v2500 = vadd.f32 %v2499, %v2469
      %v2501 = vadd.f32 %v2500, %v2470
      %v2502 = vadd.f32 %v2501, %v2471
      %v2503 = vadd.f32 %v2502, %v2472
      %v2504 = vadd.f32 %v2503, %v2473
      %v2505 = vadd.f32 %v2504, %v2474
      %v2506 = vadd.f32 %v2505, %v2475
      %v2507 = vadd.f32 %v2506, %v2476
      %v2508 = vadd.f32 %v2507, %v2477
      %v2509 = vadd.f32 %v2508, %v2478
      %v2510 = vadd.f32 %v2509, %v2479
      %v2511 = vadd.f32 %v2510, %v2480
      %v2512 = vadd.f32 %v2511, %v2481
      %v2513 = vadd.f32 %v2512, %v2482
      %v2514 = vadd.f32 %v2513, %v2483
      %v2515 = vadd.f32 %v2514, %v2484
      %v2516 = vadd.f32 %v2515, %v2485
      %v2517 = vadd.f32 %v2516, %v2486
      %v2518 = vadd.f32 %v2517, %v2487
      %v2519 = vadd.f32 %v2518, %v2488
      %v2520 = vadd.f32 %v2519, %v2489
      %v2521 = vadd.f32 %v2520, %v2490
      %v2522 = vadd.f32 %v2521, %v2491
      %v2523 = vadd.f32 %v2522, %v2492
      %v2524 = vadd.f32 %v2523, %v2493
      %v2525 = vadd.f32 %v2524, %v2494
      %v2526 = vadd.f32 %v2525, %v2495
      %v2527 = vadd.f32 %v2526, %v2496
      %v2528 = vadd.f32 %v2527, %v2497
      %v2529 = vrot.slane %v2528, 4
      %v2530 = vadd.f32 %v2528, %v2529
      %v2531 = vrot.slane %v2530, 2
      %v2532 = vadd.f32 %v2530, %v2531
      %v2533 = vrot.slane %v2532, 1
      %v2534 = vadd.f32 %v2532, %v2533
      %v2535 = vadd.f32 %v2465, %v2534
      %2536 = vst [vmem:[#allocation4] sm:$0x1] %v2535
      %p2537 = scmp.eq.s32.totalorder %s15, 1
      // Predicated region
      $region41: #{conv_bn_act.1} parent=35 // pred_check
        %p2538 = pneg %p2537
      $region42: #{conv_bn_act.1} parent=35 // pred_check_branch
        %2540 = sbr.rel (%p2538) target = $region44
      $region43: #{conv_bn_act.1} parent=35 // pred_region
        %v2541 = vld [vmem:[#allocation3] sm:$0x1]
        %v2542 = vmul.f32 %v2541, 0.001953125
        %v2543 = vld [vmem:[#allocation5] sm:$0x1]
        %v2544 = vadd.f32 %v2542, %v2543
        %v2545 = vld [vmem:[#allocation4] sm:$0x1]
        %v2546 = vmul.f32 %v2545, 0.001953125
        %v2547 = vmul.f32 %v2542, %v2542
        %v2548 = vsub.f32 %v2546, %v2547
        %v2549 = vmax.f32 %v2548, 0.0
        %v2550 = vld [vmem:[%s2] sm:$0x1]
        %v2551 = vadd.f32 %v2549, 1e-05
        %v2552 = vrsqrt.pop %v2551
        %v2553 = vmul.f32 %v2550, %v2552
        %v2554 = vld [vmem:[%s3] sm:$0x1]
        %v2555 = vmul.f32 %v2544, %v2553
        %v2556 = vsub.f32 %v2554, %v2555
        loop: start=0, step=1, limit=2
        $region45: #{conv_bn_act.1} parent=43 // loop_pre_header
          _
        $region46: #{conv_bn_act.1} parent=43 // loop_header
          %s2558 = sphi 0, %s2562
          %p2559 = scmp.ge.s32.totalorder %s2558, 2
        $region47: #{conv_bn_act.1} parent=43 // loop_header_branch
          %2561 = sbr.rel (%p2559) target = $region51
        $region48: #{conv_bn_act.1} parent=43 // loop_body
          %s2563 = smul.u32 %s2558, 256
          %s2564 = scalar_lea.vmem %s4, %s2563
          %v2565 = vld [vmem:[%s2564] sm:$0xff]
          %v2566 = vld [vmem:[%s2564 + $0x8] sm:$0xff]
          %v2567 = vld [vmem:[%s2564 + $0x10] sm:$0xff]
          %v2568 = vld [vmem:[%s2564 + $0x18] sm:$0xff]
          %v2569 = vld [vmem:[%s2564 + $0x20] sm:$0xff]
          %v2570 = vld [vmem:[%s2564 + $0x28] sm:$0xff]
          %v2571 = vld [vmem:[%s2564 + $0x30] sm:$0xff]
          %v2572 = vld [vmem:[%s2564 + $0x38] sm:$0xff]
          %v2573 = vld [vmem:[%s2564 + $0x40] sm:$0xff]
          %v2574 = vld [vmem:[%s2564 + $0x48] sm:$0xff]
          %v2575 = vld [vmem:[%s2564 + $0x50] sm:$0xff]
          %v2576 = vld [vmem:[%s2564 + $0x58] sm:$0xff]
          %v2577 = vld [vmem:[%s2564 + $0x60] sm:$0xff]
          %v2578 = vld [vmem:[%s2564 + $0x68] sm:$0xff]
          %v2579 = vld [vmem:[%s2564 + $0x70] sm:$0xff]
          %v2580 = vld [vmem:[%s2564 + $0x78] sm:$0xff]
          %v2581 = vld [vmem:[%s2564 + $0x80] sm:$0xff]
          %v2582 = vld [vmem:[%s2564 + $0x88] sm:$0xff]
          %v2583 = vld [vmem:[%s2564 + $0x90] sm:$0xff]
          %v2584 = vld [vmem:[%s2564 + $0x98] sm:$0xff]
          %v2585 = vld [vmem:[%s2564 + $0xa0] sm:$0xff]
          %v2586 = vld [vmem:[%s2564 + $0xa8] sm:$0xff]
          %v2587 = vld [vmem:[%s2564 + $0xb0] sm:$0xff]
          %v2588 = vld [vmem:[%s2564 + $0xb8] sm:$0xff]
          %v2589 = vld [vmem:[%s2564 + $0xc0] sm:$0xff]
          %v2590 = vld [vmem:[%s2564 + $0xc8] sm:$0xff]
          %v2591 = vld [vmem:[%s2564 + $0xd0] sm:$0xff]
          %v2592 = vld [vmem:[%s2564 + $0xd8] sm:$0xff]
          %v2593 = vld [vmem:[%s2564 + $0xe0] sm:$0xff]
          %v2594 = vld [vmem:[%s2564 + $0xe8] sm:$0xff]
          %v2595 = vld [vmem:[%s2564 + $0xf0] sm:$0xff]
          %v2596 = vld [vmem:[%s2564 + $0xf8] sm:$0xff]
          %v2598 = vlaneseq
          %v2599 = vshrl.u32 %v2598, 7
          %v2600 = vsub.s32 0, %v2599
          %v2601 = vrot.slane %v2553, %v2600
          %v2603 = vmul.f32 %v2565, %v2601
          %v2604 = vmul.f32 %v2566, %v2601
          %v2605 = vmul.f32 %v2567, %v2601
          %v2606 = vmul.f32 %v2568, %v2601
          %v2607 = vmul.f32 %v2569, %v2601
          %v2608 = vmul.f32 %v2570, %v2601
          %v2609 = vmul.f32 %v2571, %v2601
          %v2610 = vmul.f32 %v2572, %v2601
          %v2611 = vmul.f32 %v2573, %v2601
          %v2612 = vmul.f32 %v2574, %v2601
          %v2613 = vmul.f32 %v2575, %v2601
          %v2614 = vmul.f32 %v2576, %v2601
          %v2615 = vmul.f32 %v2577, %v2601
          %v2616 = vmul.f32 %v2578, %v2601
          %v2617 = vmul.f32 %v2579, %v2601
          %v2618 = vmul.f32 %v2580, %v2601
          %v2619 = vmul.f32 %v2581, %v2601
          %v2620 = vmul.f32 %v2582, %v2601
          %v2621 = vmul.f32 %v2583, %v2601
          %v2622 = vmul.f32 %v2584, %v2601
          %v2623 = vmul.f32 %v2585, %v2601
          %v2624 = vmul.f32 %v2586, %v2601
          %v2625 = vmul.f32 %v2587, %v2601
          %v2626 = vmul.f32 %v2588, %v2601
          %v2627 = vmul.f32 %v2589, %v2601
          %v2628 = vmul.f32 %v2590, %v2601
          %v2629 = vmul.f32 %v2591, %v2601
          %v2630 = vmul.f32 %v2592, %v2601
          %v2631 = vmul.f32 %v2593, %v2601
          %v2632 = vmul.f32 %v2594, %v2601
          %v2633 = vmul.f32 %v2595, %v2601
          %v2634 = vmul.f32 %v2596, %v2601
          %v2636 = vlaneseq
          %v2637 = vshrl.u32 %v2636, 7
          %v2638 = vsub.s32 0, %v2637
          %v2639 = vrot.slane %v2556, %v2638
          %v2641 = vadd.f32 %v2603, %v2639
          %v2642 = vadd.f32 %v2604, %v2639
          %v2643 = vadd.f32 %v2605, %v2639
          %v2644 = vadd.f32 %v2606, %v2639
          %v2645 = vadd.f32 %v2607, %v2639
          %v2646 = vadd.f32 %v2608, %v2639
          %v2647 = vadd.f32 %v2609, %v2639
          %v2648 = vadd.f32 %v2610, %v2639
          %v2649 = vadd.f32 %v2611, %v2639
          %v2650 = vadd.f32 %v2612, %v2639
          %v2651 = vadd.f32 %v2613, %v2639
          %v2652 = vadd.f32 %v2614, %v2639
          %v2653 = vadd.f32 %v2615, %v2639
          %v2654 = vadd.f32 %v2616, %v2639
          %v2655 = vadd.f32 %v2617, %v2639
          %v2656 = vadd.f32 %v2618, %v2639
          %v2657 = vadd.f32 %v2619, %v2639
          %v2658 = vadd.f32 %v2620, %v2639
          %v2659 = vadd.f32 %v2621, %v2639
          %v2660 = vadd.f32 %v2622, %v2639
          %v2661 = vadd.f32 %v2623, %v2639
          %v2662 = vadd.f32 %v2624, %v2639
          %v2663 = vadd.f32 %v2625, %v2639
          %v2664 = vadd.f32 %v2626, %v2639
          %v2665 = vadd.f32 %v2627, %v2639
          %v2666 = vadd.f32 %v2628, %v2639
          %v2667 = vadd.f32 %v2629, %v2639
          %v2668 = vadd.f32 %v2630, %v2639
          %v2669 = vadd.f32 %v2631, %v2639
          %v2670 = vadd.f32 %v2632, %v2639
          %v2671 = vadd.f32 %v2633, %v2639
          %v2672 = vadd.f32 %v2634, %v2639
          %vm2673 = vcmp.ge.f32.partialorder %v2641, 0.0
          %vm2674 = vcmp.ge.f32.partialorder %v2642, 0.0
          %vm2675 = vcmp.ge.f32.partialorder %v2643, 0.0
          %vm2676 = vcmp.ge.f32.partialorder %v2644, 0.0
          %vm2677 = vcmp.ge.f32.partialorder %v2645, 0.0
          %vm2678 = vcmp.ge.f32.partialorder %v2646, 0.0
          %vm2679 = vcmp.ge.f32.partialorder %v2647, 0.0
          %vm2680 = vcmp.ge.f32.partialorder %v2648, 0.0
          %vm2681 = vcmp.ge.f32.partialorder %v2649, 0.0
          %vm2682 = vcmp.ge.f32.partialorder %v2650, 0.0
          %vm2683 = vcmp.ge.f32.partialorder %v2651, 0.0
          %vm2684 = vcmp.ge.f32.partialorder %v2652, 0.0
          %vm2685 = vcmp.ge.f32.partialorder %v2653, 0.0
          %vm2686 = vcmp.ge.f32.partialorder %v2654, 0.0
          %vm2687 = vcmp.ge.f32.partialorder %v2655, 0.0
          %vm2688 = vcmp.ge.f32.partialorder %v2656, 0.0
          %vm2689 = vcmp.ge.f32.partialorder %v2657, 0.0
          %vm2690 = vcmp.ge.f32.partialorder %v2658, 0.0
          %vm2691 = vcmp.ge.f32.partialorder %v2659, 0.0
          %vm2692 = vcmp.ge.f32.partialorder %v2660, 0.0
          %vm2693 = vcmp.ge.f32.partialorder %v2661, 0.0
          %vm2694 = vcmp.ge.f32.partialorder %v2662, 0.0
          %vm2695 = vcmp.ge.f32.partialorder %v2663, 0.0
          %vm2696 = vcmp.ge.f32.partialorder %v2664, 0.0
          %vm2697 = vcmp.ge.f32.partialorder %v2665, 0.0
          %vm2698 = vcmp.ge.f32.partialorder %v2666, 0.0
          %vm2699 = vcmp.ge.f32.partialorder %v2667, 0.0
          %vm2700 = vcmp.ge.f32.partialorder %v2668, 0.0
          %vm2701 = vcmp.ge.f32.partialorder %v2669, 0.0
          %vm2702 = vcmp.ge.f32.partialorder %v2670, 0.0
          %vm2703 = vcmp.ge.f32.partialorder %v2671, 0.0
          %vm2704 = vcmp.ge.f32.partialorder %v2672, 0.0
          %v2705 = vmul.f32 %v2641, 0.01
          %v2706 = vmul.f32 %v2642, 0.01
          %v2707 = vmul.f32 %v2643, 0.01
          %v2708 = vmul.f32 %v2644, 0.01
          %v2709 = vmul.f32 %v2645, 0.01
          %v2710 = vmul.f32 %v2646, 0.01
          %v2711 = vmul.f32 %v2647, 0.01
          %v2712 = vmul.f32 %v2648, 0.01
          %v2713 = vmul.f32 %v2649, 0.01
          %v2714 = vmul.f32 %v2650, 0.01
          %v2715 = vmul.f32 %v2651, 0.01
          %v2716 = vmul.f32 %v2652, 0.01
          %v2717 = vmul.f32 %v2653, 0.01
          %v2718 = vmul.f32 %v2654, 0.01
          %v2719 = vmul.f32 %v2655, 0.01
          %v2720 = vmul.f32 %v2656, 0.01
          %v2721 = vmul.f32 %v2657, 0.01
          %v2722 = vmul.f32 %v2658, 0.01
          %v2723 = vmul.f32 %v2659, 0.01
          %v2724 = vmul.f32 %v2660, 0.01
          %v2725 = vmul.f32 %v2661, 0.01
          %v2726 = vmul.f32 %v2662, 0.01
          %v2727 = vmul.f32 %v2663, 0.01
          %v2728 = vmul.f32 %v2664, 0.01
          %v2729 = vmul.f32 %v2665, 0.01
          %v2730 = vmul.f32 %v2666, 0.01
          %v2731 = vmul.f32 %v2667, 0.01
          %v2732 = vmul.f32 %v2668, 0.01
          %v2733 = vmul.f32 %v2669, 0.01
          %v2734 = vmul.f32 %v2670, 0.01
          %v2735 = vmul.f32 %v2671, 0.01
          %v2736 = vmul.f32 %v2672, 0.01
          %v2737 = vsel %vm2673, %v2641, %v2705
          %v2738 = vsel %vm2674, %v2642, %v2706
          %v2739 = vsel %vm2675, %v2643, %v2707
          %v2740 = vsel %vm2676, %v2644, %v2708
          %v2741 = vsel %vm2677, %v2645, %v2709
          %v2742 = vsel %vm2678, %v2646, %v2710
          %v2743 = vsel %vm2679, %v2647, %v2711
          %v2744 = vsel %vm2680, %v2648, %v2712
          %v2745 = vsel %vm2681, %v2649, %v2713
          %v2746 = vsel %vm2682, %v2650, %v2714
          %v2747 = vsel %vm2683, %v2651, %v2715
          %v2748 = vsel %vm2684, %v2652, %v2716
          %v2749 = vsel %vm2685, %v2653, %v2717
          %v2750 = vsel %vm2686, %v2654, %v2718
          %v2751 = vsel %vm2687, %v2655, %v2719
          %v2752 = vsel %vm2688, %v2656, %v2720
          %v2753 = vsel %vm2689, %v2657, %v2721
          %v2754 = vsel %vm2690, %v2658, %v2722
          %v2755 = vsel %vm2691, %v2659, %v2723
          %v2756 = vsel %vm2692, %v2660, %v2724
          %v2757 = vsel %vm2693, %v2661, %v2725
          %v2758 = vsel %vm2694, %v2662, %v2726
          %v2759 = vsel %vm2695, %v2663, %v2727
          %v2760 = vsel %vm2696, %v2664, %v2728
          %v2761 = vsel %vm2697, %v2665, %v2729
          %v2762 = vsel %vm2698, %v2666, %v2730
          %v2763 = vsel %vm2699, %v2667, %v2731
          %v2764 = vsel %vm2700, %v2668, %v2732
          %v2765 = vsel %vm2701, %v2669, %v2733
          %v2766 = vsel %vm2702, %v2670, %v2734
          %v2767 = vsel %vm2703, %v2671, %v2735
          %v2768 = vsel %vm2704, %v2672, %v2736
          %2769 = vst [vmem:[%s2564] sm:$0xff] %v2737
          %2770 = vst [vmem:[%s2564 + $0x8] sm:$0xff] %v2738
          %2771 = vst [vmem:[%s2564 + $0x10] sm:$0xff] %v2739
          %2772 = vst [vmem:[%s2564 + $0x18] sm:$0xff] %v2740
          %2773 = vst [vmem:[%s2564 + $0x20] sm:$0xff] %v2741
          %2774 = vst [vmem:[%s2564 + $0x28] sm:$0xff] %v2742
          %2775 = vst [vmem:[%s2564 + $0x30] sm:$0xff] %v2743
          %2776 = vst [vmem:[%s2564 + $0x38] sm:$0xff] %v2744
          %2777 = vst [vmem:[%s2564 + $0x40] sm:$0xff] %v2745
          %2778 = vst [vmem:[%s2564 + $0x48] sm:$0xff] %v2746
          %2779 = vst [vmem:[%s2564 + $0x50] sm:$0xff] %v2747
          %2780 = vst [vmem:[%s2564 + $0x58] sm:$0xff] %v2748
          %2781 = vst [vmem:[%s2564 + $0x60] sm:$0xff] %v2749
          %2782 = vst [vmem:[%s2564 + $0x68] sm:$0xff] %v2750
          %2783 = vst [vmem:[%s2564 + $0x70] sm:$0xff] %v2751
          %2784 = vst [vmem:[%s2564 + $0x78] sm:$0xff] %v2752
          %2785 = vst [vmem:[%s2564 + $0x80] sm:$0xff] %v2753
          %2786 = vst [vmem:[%s2564 + $0x88] sm:$0xff] %v2754
          %2787 = vst [vmem:[%s2564 + $0x90] sm:$0xff] %v2755
          %2788 = vst [vmem:[%s2564 + $0x98] sm:$0xff] %v2756
          %2789 = vst [vmem:[%s2564 + $0xa0] sm:$0xff] %v2757
          %2790 = vst [vmem:[%s2564 + $0xa8] sm:$0xff] %v2758
          %2791 = vst [vmem:[%s2564 + $0xb0] sm:$0xff] %v2759
          %2792 = vst [vmem:[%s2564 + $0xb8] sm:$0xff] %v2760
          %2793 = vst [vmem:[%s2564 + $0xc0] sm:$0xff] %v2761
          %2794 = vst [vmem:[%s2564 + $0xc8] sm:$0xff] %v2762
          %2795 = vst [vmem:[%s2564 + $0xd0] sm:$0xff] %v2763
          %2796 = vst [vmem:[%s2564 + $0xd8] sm:$0xff] %v2764
          %2797 = vst [vmem:[%s2564 + $0xe0] sm:$0xff] %v2765
          %2798 = vst [vmem:[%s2564 + $0xe8] sm:$0xff] %v2766
          %2799 = vst [vmem:[%s2564 + $0xf0] sm:$0xff] %v2767
          %2800 = vst [vmem:[%s2564 + $0xf8] sm:$0xff] %v2768
        $region49: #{conv_bn_act.1} parent=43 // loop_footer
          %s2562 = sadd.s32 1, %s2558
        $region50: #{conv_bn_act.1} parent=43 // loop_footer_branch
          %2557 = sbr.rel target = $region46
        $region51: #{conv_bn_act.1} parent=43 // loop_exit
          _
      $region44: #{conv_bn_act.1} parent=35 // pred_fallthru
        _
      // Predicated region
      $region52: #{conv_bn_act.1} parent=35 // pred_check
        %p2801 = pneg %p117
      $region53: #{conv_bn_act.1} parent=35 // pred_check_branch
        %2803 = sbr.rel (%p2801) target = $region55
      $region54: #{conv_bn_act.1} parent=35 // pred_region
        _
      $region55: #{conv_bn_act.1} parent=35 // pred_fallthru
        _
      // Predicated region
      $region56: #{conv_bn_act.1} parent=35 // pred_check
        %p2804 = pneg %p117
      $region57: #{conv_bn_act.1} parent=35 // pred_check_branch
        %2806 = sbr.rel (%p2804) target = $region59
      $region58: #{conv_bn_act.1} parent=35 // pred_region
        _
      $region59: #{conv_bn_act.1} parent=35 // pred_fallthru
        _
    $region36: #{conv_bn_act.1} parent=5 // pred_fallthru
      _
    %p2807 = scmp.le.s32.totalorder 2, %s10
    // Predicated region
    $region60: #{conv_bn_act.1} parent=5 // pred_check
      %p2808 = pneg %p2807
    $region61: #{conv_bn_act.1} parent=5 // pred_check_branch
      %2810 = sbr.rel (%p2808) target = $region63
    $region62: #{conv_bn_act.1} parent=5 // pred_region
      %s2811 = ssub.s32 %s10, 2
    $region63: #{conv_bn_act.1} parent=5 // pred_fallthru
      _
  $region6: #{conv_bn_act.1} parent=0 // loop_footer
    %s14 = sadd.s32 1, %s10
  $region7: #{conv_bn_act.1} parent=0 // loop_footer_branch
    %9 = sbr.rel target = $region3
  $region8: #{conv_bn_act.1} parent=0 // loop_exit
    _

</llo_original>
